<compile_context>
chip_gen: v7x
topology: tpu7x:2x2x1
jax: 0.10.0
libtpu: 0.0.40
codegen_flags: <defaults>
</compile_context>

<pallas_src>
import functools

import jax
import jax.numpy as jnp
import numpy as np
from jax import lax
from jax.experimental import pallas as pl
from jax.experimental.pallas import tpu as pltpu


def _round_up(x: int, m: int) -> int:
    return (x + m - 1) // m * m


@functools.lru_cache(maxsize=None)
def _vmem_limit_bytes() -> int:
    # ~85% of physical VMEM per TensorCore: leaves headroom for Mosaic internal
    # scratch/semaphores (v7x: 64 MiB phys -> ~54 MiB; v5e/v6e: 128 -> ~109 MiB).
    try:
        cap = int(pltpu.get_tpu_info().vmem_capacity_bytes)
        return int(cap * 0.85)
    except Exception:
        return 48 * 1024 * 1024


# ----------------------------------------------------------------------------
# Tiled matmul kernel (fused qkvg projection, s projection, o_proj).
# ----------------------------------------------------------------------------
def _matmul_kernel(x_ref, w_ref, o_ref, acc_ref, *, compute_dtype):
    @pl.when(pl.program_id(2) == 0)
    def _():
        acc_ref[...] = jnp.zeros_like(acc_ref)

    acc_ref[...] += jnp.dot(x_ref[...].astype(compute_dtype),
                            w_ref[...].astype(compute_dtype),
                            preferred_element_type=jnp.float32)

    @pl.when(pl.program_id(2) == pl.num_programs(2) - 1)
    def _():
        o_ref[...] = acc_ref[...].astype(o_ref.dtype)


def matmul_pallas(x, w, *, out_dtype=jnp.bfloat16, compute_dtype=jnp.bfloat16,
                  tm=512, tn=512, tk=512):
    """x:[M,K] @ w:[K,N] -> [M,N]; ragged dims are padded (no full-extent blocks)."""
    M, K = x.shape
    K2, N = w.shape
    assert K == K2
    tm = min(tm, _round_up(M, 16))
    tn = min(tn, _round_up(N, 128))
    tk = min(tk, _round_up(K, 128))
    Mp, Np, Kp = _round_up(M, tm), _round_up(N, tn), _round_up(K, tk)
    if (Mp, Kp) != (M, K):
        x = jnp.pad(x, ((0, Mp - M), (0, Kp - K)))
    if (Kp, Np) != (K, N):
        w = jnp.pad(w, ((0, Kp - K), (0, Np - N)))

    flops = 2 * Mp * Np * Kp
    bytes_accessed = (Mp * Kp * x.dtype.itemsize + Kp * Np * w.dtype.itemsize
                      + Mp * Np * np.dtype(out_dtype).itemsize)

    out = pl.pallas_call(
        functools.partial(_matmul_kernel, compute_dtype=compute_dtype),
        out_shape=jax.ShapeDtypeStruct((Mp, Np), out_dtype),
        grid=(Mp // tm, Np // tn, Kp // tk),
        in_specs=[pl.BlockSpec((tm, tk), lambda i, j, k: (i, k)),
                  pl.BlockSpec((tk, tn), lambda i, j, k: (k, j))],
        out_specs=pl.BlockSpec((tm, tn), lambda i, j, k: (i, j)),
        scratch_shapes=[pltpu.VMEM((tm, tn), jnp.float32)],
        compiler_params=pltpu.CompilerParams(
            dimension_semantics=("parallel", "parallel", "arbitrary"),
            vmem_limit_bytes=_vmem_limit_bytes()),
        cost_estimate=pl.CostEstimate(flops=int(flops), transcendentals=0,
                                      bytes_accessed=int(bytes_accessed)),
    )(x, w)
    if (Mp, Np) != (M, N):
        out = out[:M, :N]
    return out


# ----------------------------------------------------------------------------
# ABC attention kernel: RoPE + chunked slot recurrence + gated RMSNorm.
# grid = (batch, time-chunk); all heads handled inside one step (lane-dense).
# Cross-chunk state (slot denominator Z, Hk, Hv) lives in VMEM scratch.
# ----------------------------------------------------------------------------
def _abc_chunk_kernel(y_ref, s_ref, cos_ref, sin_ref, gw_ref,
                      o_ref,
                      zden_ref, hk_ref, hv_ref,
                      *, H, Dk, Dv, M, scale, eps, clamp_min, clamp_max):
    f32 = jnp.float32
    bf16 = jnp.bfloat16
    c = pl.program_id(1)

    # Reset the recurrent state at the first time-chunk of every batch element.
    @pl.when(c == 0)
    def _():
        zden_ref[...] = jnp.zeros_like(zden_ref)
        hk_ref[...] = jnp.zeros_like(hk_ref)
        hv_ref[...] = jnp.zeros_like(hv_ref)

    BT = y_ref.shape[1]
    KD = H * Dk
    VD = H * Dv
    half = Dk // 2

    cos = cos_ref[...]                                   # (BT, Dk) f32
    sin = sin_ref[...]                                   # (BT, Dk) f32
    gw = gw_ref[...]                                     # (1, Dv)  f32

    # --- slot logits: clamp + exp; prefix sums for ALL heads in one matmul ----
    s = jnp.clip(s_ref[0], clamp_min, clamp_max)         # (BT, H*M) f32
    e = jnp.exp(s - clamp_max)                           # in (0, 1]
    e_bf = e.astype(bf16)

    row = lax.broadcasted_iota(jnp.int32, (BT, BT), 0)
    col = lax.broadcasted_iota(jnp.int32, (BT, BT), 1)
    causal = col <= row
    tri_bf = causal.astype(bf16)

    csum = jnp.dot(tri_bf, e_bf, preferred_element_type=f32)   # (BT, H*M)

    for h in range(H):                                   # H is small & static
        sl_m = slice(h * M, (h + 1) * M)
        sl_v = slice(h * Dv, (h + 1) * Dv)

        # --- RoPE per head: rotate-half via lane slices (no perm matmul) -----
        qh = y_ref[0, :, h * Dk:(h + 1) * Dk].astype(f32)            # (BT, Dk)
        kh = y_ref[0, :, KD + h * Dk:KD + (h + 1) * Dk].astype(f32)
        q_rot = jnp.concatenate([-qh[:, half:], qh[:, :half]], axis=-1)
        k_rot = jnp.concatenate([-kh[:, half:], kh[:, :half]], axis=-1)
        qs = ((qh * cos + q_rot * sin) * scale).astype(bf16)   # fold q-scale
        ks = (kh * cos + k_rot * sin).astype(bf16)

        vs = y_ref[0, :, 2 * KD + h * Dv:2 * KD + (h + 1) * Dv]      # bf16
        gh = y_ref[0, :, 2 * KD + VD + h * Dv:
                   2 * KD + VD + (h + 1) * Dv].astype(f32)

        es = e_bf[:, sl_m]                               # (BT, M)
        z_prev = zden_ref[:, sl_m]                       # (1, M) f32
        rz = 1.0 / (csum[:, sl_m] + z_prev)              # exact 1/Z_t, (BT, M)

        hkp = hk_ref[:, sl_m]                            # (Dk, M) f32
        hvp = hv_ref[:, sl_v]                            # (M, Dv) f32

        # --- stage 1: slot read logits + softmax over slots -------------------
        A = lax.dot_general(qs, ks, (((1,), (1,)), ((), ())),
                            preferred_element_type=f32)  # (BT, BT)
        A = jnp.where(causal, A, 0.0).astype(bf16)
        ok = (jnp.dot(qs, hkp.astype(bf16), preferred_element_type=f32)
              + jnp.dot(A, es, preferred_element_type=f32)) * rz
        ok = ok - jnp.max(ok, axis=-1, keepdims=True)
        pk = jnp.exp(ok)
        qv = pk * pl.reciprocal(jnp.sum(pk, axis=-1, keepdims=True), approx=True)

        # --- stage 2: read values through the slots ---------------------------
        w = (qv * rz).astype(bf16)                       # (BT, M)
        Bm = lax.dot_general(w, es, (((1,), (1,)), ((), ())),
                             preferred_element_type=f32)  # (BT, BT)
        Bm = jnp.where(causal, Bm, 0.0).astype(bf16)
        ov = (jnp.dot(w, hvp.astype(bf16), preferred_element_type=f32)
              + jnp.dot(Bm, vs, preferred_element_type=f32))   # (BT, Dv) f32

        # --- FusedRMSNormGated: RMSNorm(ov) * weight * swish(g) ---------------
        var = jnp.mean(ov * ov, axis=-1, keepdims=True)
        o_n = ov * lax.rsqrt(var + eps) * gw
        o_ref[0, :, sl_v] = (o_n * (gh * jax.nn.sigmoid(gh))).astype(o_ref.dtype)

        # --- carry recurrent state to the next chunk (per-head, in-place) -----
        zden_ref[:, sl_m] = z_prev + jnp.sum(e[:, sl_m], axis=0, keepdims=True)
        hk_ref[:, sl_m] = hkp + lax.dot_general(
            ks, es, (((0,), (0,)), ((), ())), preferred_element_type=f32)
        hv_ref[:, sl_v] = hvp + lax.dot_general(
            es, vs, (((0,), (0,)), ((), ())), preferred_element_type=f32)


def abc_pallas(y, s, cos, sin, gw, *, num_heads, head_k_dim, head_v_dim,
               num_slots, scale, eps, clamp_min, clamp_max, chunk_size):
    B, T, _ = y.shape
    H, Dk, Dv, M = num_heads, head_k_dim, head_v_dim, num_slots
    BT = chunk_size
    assert T % BT == 0
    NC = T // BT
    KD, VD, SD = H * Dk, H * Dv, H * M
    YW = 2 * KD + 2 * VD
    assert y.shape[-1] == YW and s.shape[-1] == SD

    kernel = functools.partial(_abc_chunk_kernel, H=H, Dk=Dk, Dv=Dv, M=M,
                               scale=scale, eps=eps,
                               clamp_min=clamp_min, clamp_max=clamp_max)

    flops = 2 * B * H * T * (BT * (Dk + 3 * M + 2 * Dv) + 2 * M * (Dk + Dv))
    transcendentals = B * T * H * (2 * M + Dv)
    bytes_accessed = (int(y.size) * y.dtype.itemsize
                      + int(s.size) * s.dtype.itemsize
                      + B * (int(cos.size) + int(sin.size)) * 4
                      + B * T * VD * 2)

    return pl.pallas_call(
        kernel,
        out_shape=jax.ShapeDtypeStruct((B, T, VD), jnp.bfloat16),
        grid=(B, NC),
        in_specs=[
            pl.BlockSpec((1, BT, YW), lambda b, c: (b, c, 0)),   # fused q|k|v|g
            pl.BlockSpec((1, BT, SD), lambda b, c: (b, c, 0)),   # slot logits (f32)
            pl.BlockSpec((BT, Dk), lambda b, c: (c, 0)),         # RoPE cos (T, Dk)
            pl.BlockSpec((BT, Dk), lambda b, c: (c, 0)),         # RoPE sin (T, Dk)
            pl.BlockSpec((1, Dv), lambda b, c: (0, 0)),          # g_norm weight
        ],
        out_specs=pl.BlockSpec((1, BT, VD), lambda b, c: (b, c, 0)),
        scratch_shapes=[
            pltpu.VMEM((1, SD), jnp.float32),    # running slot denominator Z
            pltpu.VMEM((Dk, SD), jnp.float32),   # Hk state (per-head lane blocks)
            pltpu.VMEM((M, VD), jnp.float32),    # Hv state (per-head lane blocks)
        ],
        compiler_params=pltpu.CompilerParams(
            dimension_semantics=("parallel", "arbitrary"),
            vmem_limit_bytes=_vmem_limit_bytes()),
        cost_estimate=pl.CostEstimate(flops=int(flops),
                                      transcendentals=int(transcendentals),
                                      bytes_accessed=int(bytes_accessed)),
    )(y, s, cos, sin, gw)


# ----------------------------------------------------------------------------
# One-time parameter preparation (outside the per-call path).
# ----------------------------------------------------------------------------
def prepare_abc_params(params, *, head_k_dim, head_v_dim, max_seqlen,
                       rope_base=10000.0):
    w_qkvg = jnp.concatenate(
        [params["Wq"], params["Wk"], params["Wv"], params["Wg"]],
        axis=1).astype(jnp.bfloat16)
    w_s = params["Ws"].astype(jnp.float32)        # keep slot logits in f32
    w_o = params["Wo"].astype(jnp.bfloat16)

    half = head_k_dim // 2
    inv_freq = rope_base ** (-(jnp.arange(half, dtype=jnp.float32) / half))
    pos = jnp.arange(max_seqlen, dtype=jnp.float32)
    freqs = pos[:, None] * inv_freq[None, :]                        # (T, half)
    cos = jnp.concatenate([jnp.cos(freqs)] * 2, axis=-1)            # (T, Dk)
    sin = jnp.concatenate([jnp.sin(freqs)] * 2, axis=-1)            # (T, Dk)

    gw = params["g_norm_weight"].reshape(1, head_v_dim).astype(jnp.float32)
    return dict(w_qkvg=w_qkvg, w_s=w_s, w_o=w_o, cos=cos, sin=sin, gw=gw)


# ----------------------------------------------------------------------------
# Full forward (JAX glue around the Pallas kernels).
# ----------------------------------------------------------------------------
def abc_attention_forward(x, prepared, *, num_heads, head_k_dim, head_v_dim,
                          num_slots, norm_eps, clamp_min, clamp_max,
                          chunk_size=128):
    B, T, hidden = x.shape
    H = num_heads
    KD, VD, SD = H * head_k_dim, H * head_v_dim, H * num_slots

    x2 = x.reshape(B * T, hidden)
    # fused q/k/v/g projection (bf16, f32 accumulation); s projected in f32.
    y = matmul_pallas(x2, prepared["w_qkvg"],
                      out_dtype=jnp.bfloat16, compute_dtype=jnp.bfloat16)
    s = matmul_pallas(x2, prepared["w_s"],
                      out_dtype=jnp.float32, compute_dtype=jnp.float32)
    y = y.reshape(B, T, 2 * KD + 2 * VD)
    s = s.reshape(B, T, SD)

    # Time chunking: pad T up to a multiple of the chunk (chunk % 16 == 0).
    bt = min(chunk_size, _round_up(T, 16))
    Tp = _round_up(T, bt)
    if Tp != T:
        y = jnp.pad(y, ((0, 0), (0, Tp - T), (0, 0)))
        s = jnp.pad(s, ((0, 0), (0, Tp - T), (0, 0)))
    cos, sin = prepared["cos"], prepared["sin"]
    if cos.shape[0] < Tp:
        pad = Tp - cos.shape[0]
        cos = jnp.pad(cos, ((0, pad), (0, 0)))
        sin = jnp.pad(sin, ((0, pad), (0, 0)))
    else:
        cos, sin = cos[:Tp], sin[:Tp]

    o = abc_pallas(y, s, cos, sin, prepared["gw"],
                   num_heads=H, head_k_dim=head_k_dim, head_v_dim=head_v_dim,
                   num_slots=num_slots, scale=head_k_dim ** -0.5, eps=norm_eps,
                   clamp_min=float(clamp_min), clamp_max=float(clamp_max),
                   chunk_size=bt)                 # (B, Tp, H*Dv), lane-dense bf16
    if Tp != T:
        o = o[:, :T]

    out = matmul_pallas(o.reshape(B * T, VD), prepared["w_o"],
                        out_dtype=jnp.float32, compute_dtype=jnp.bfloat16)
    return out.reshape(B, T, hidden)


if __name__ == "__main__":
    # Small config consistent with the module's defaults (scaled down).
    B, T = 2, 256
    hidden_size = 64
    num_heads = 2
    expand_k, expand_v = 0.5, 1.0
    key_dim = int(hidden_size * expand_k)        # 32
    value_dim = int(hidden_size * expand_v)      # 64
    head_k_dim = key_dim // num_heads            # 16
    head_v_dim = value_dim // num_heads          # 32
    num_slots = head_k_dim                       # 16
    norm_eps = 1e-5
    clamp_min, clamp_max = -32.0, 32.0

    key = jax.random.PRNGKey(0)
    kx, kq, kk, kv, kg, ks, ko = jax.random.split(key, 7)
    x = jax.random.normal(kx, (B, T, hidden_size), jnp.float32)

    init = lambda k_, shape: 0.02 * jax.random.normal(k_, shape, jnp.float32)
    # nn.Linear weights are (out, in) in torch; stored here pre-transposed (in, out).
    params = {
        "Wq": init(kq, (hidden_size, key_dim)),
        "Wk": init(kk, (hidden_size, key_dim)),
        "Wv": init(kv, (hidden_size, value_dim)),
        "Wg": init(kg, (hidden_size, value_dim)),
        "Ws": init(ks, (hidden_size, num_heads * num_slots)),
        "Wo": init(ko, (value_dim, hidden_size)),
        "g_norm_weight": jnp.ones((head_v_dim,), jnp.float32),
    }

    prepared = prepare_abc_params(params, head_k_dim=head_k_dim,
                                  head_v_dim=head_v_dim, max_seqlen=T)

    out = abc_attention_forward(
        x, prepared,
        num_heads=num_heads, head_k_dim=head_k_dim, head_v_dim=head_v_dim,
        num_slots=num_slots, norm_eps=norm_eps,
        clamp_min=clamp_min, clamp_max=clamp_max,
        chunk_size=128,   # T=256 -> 2 time chunks, exercises the cross-chunk carry
    )
    jax.block_until_ready(out)
    assert out.shape == (B, T, hidden_size)
    assert bool(jnp.all(jnp.isfinite(out)))
    print("KERNEL_OK")
</pallas_src>

<mosaic_0001>
module attributes {stable_mosaic.version = 11 : i64} {
  func.func @_matmul_kernel(%arg0: i32, %arg1: i32, %arg2: i32, %arg3: memref<512x128xf32, #tpu.memory_space<vmem>>, %arg4: memref<128x256xbf16, #tpu.memory_space<vmem>>, %arg5: memref<512x256xbf16, #tpu.memory_space<vmem>>, %arg6: memref<512x256xf32, #tpu.memory_space<vmem>>) attributes {dimension_semantics = [#tpu.dimension_semantics<parallel>, #tpu.dimension_semantics<parallel>, #tpu.dimension_semantics<arbitrary>], iteration_bounds = array<i64: 1, 1, 1>, scalar_prefetch = 0 : i64, scratch_operands = 1 : i64, tpu.core_type = #tpu.core_type<tc>, window_params = [{transform_indices = @transform_0, window_bounds = array<i64: 512, 128>}, {transform_indices = @transform_1, window_bounds = array<i64: 128, 256>}, {transform_indices = @transform_2, window_bounds = array<i64: 512, 256>}]} {
    %c0_i32 = arith.constant 0 : i32
    %0 = arith.cmpi eq, %arg2, %c0_i32 : i32
    %1 = arith.extui %0 : i1 to i32
    %c0_i32_0 = arith.constant 0 : i32
    %2 = arith.cmpi ne, %1, %c0_i32_0 : i32
    scf.if %2 {
      %cst_10 = arith.constant 0.000000e+00 : f32
      %13 = vector.broadcast %cst_10 : f32 to vector<512x256xf32>
      %c0_11 = arith.constant 0 : index
      %c0_12 = arith.constant 0 : index
      %14 = vector.load %arg6[%c0_11, %c0_12] : memref<512x256xf32, #tpu.memory_space<vmem>>, vector<512x256xf32>
      tpu.vector_store %arg6[%c0_11, %c0_12], %13 {strides = array<i32>} : memref<512x256xf32, #tpu.memory_space<vmem>>, vector<512x256xf32>,
    } else {
    }
    %c0 = arith.constant 0 : index
    %c0_1 = arith.constant 0 : index
    %3 = vector.load %arg6[%c0, %c0_1] : memref<512x256xf32, #tpu.memory_space<vmem>>, vector<512x256xf32>
    %c0_2 = arith.constant 0 : index
    %c0_3 = arith.constant 0 : index
    %4 = vector.load %arg3[%c0_2, %c0_3] : memref<512x128xf32, #tpu.memory_space<vmem>>, vector<512x128xf32>
    %5 = arith.truncf %4 : vector<512x128xf32> to vector<512x128xbf16>
    %c0_4 = arith.constant 0 : index
    %c0_5 = arith.constant 0 : index
    %6 = vector.load %arg4[%c0_4, %c0_5] : memref<128x256xbf16, #tpu.memory_space<vmem>>, vector<128x256xbf16>
    %cst = arith.constant dense<0.000000e+00> : vector<512x256xf32>
    %7 = tpu.matmul %5, %6, %cst {dimension_numbers = #tpu.dot_dimension_numbers<[1], [0], [0], [1], [0, 0, 1, 1], [], []>} : vector<512x128xbf16>, vector<128x256xbf16>, vector<512x256xf32> -> vector<512x256xf32>
    %8 = arith.addf %3, %7 : vector<512x256xf32>
    %c0_6 = arith.constant 0 : index
    %c0_7 = arith.constant 0 : index
    %9 = vector.load %arg6[%c0_6, %c0_7] : memref<512x256xf32, #tpu.memory_space<vmem>>, vector<512x256xf32>
    tpu.vector_store %arg6[%c0_6, %c0_7], %8 {strides = array<i32>} : memref<512x256xf32, #tpu.memory_space<vmem>>, vector<512x256xf32>,
    %c0_i32_8 = arith.constant 0 : i32
    %10 = arith.cmpi eq, %arg2, %c0_i32_8 : i32
    %11 = arith.extui %10 : i1 to i32
    %c0_i32_9 = arith.constant 0 : i32
    %12 = arith.cmpi ne, %11, %c0_i32_9 : i32
    scf.if %12 {
      %c0_10 = arith.constant 0 : index
      %c0_11 = arith.constant 0 : index
      %13 = vector.load %arg6[%c0_10, %c0_11] : memref<512x256xf32, #tpu.memory_space<vmem>>, vector<512x256xf32>
      %14 = arith.truncf %13 : vector<512x256xf32> to vector<512x256xbf16>
      %c0_12 = arith.constant 0 : index
      %c0_13 = arith.constant 0 : index
      %15 = vector.load %arg5[%c0_12, %c0_13] : memref<512x256xbf16, #tpu.memory_space<vmem>>, vector<512x256xbf16>
      tpu.vector_store %arg5[%c0_12, %c0_13], %14 {strides = array<i32>} : memref<512x256xbf16, #tpu.memory_space<vmem>>, vector<512x256xbf16>,
    } else {
    }
    return
  }
  func.func @transform_0(%arg0: i32, %arg1: i32, %arg2: i32) -> (i32, i32) {
    %c0_i32 = arith.constant 0 : i32
    return %arg0, %arg2 : i32, i32
  }
  func.func @transform_1(%arg0: i32, %arg1: i32, %arg2: i32) -> (i32, i32) {
    %c0_i32 = arith.constant 0 : i32
    return %arg2, %arg1 : i32, i32
  }
  func.func @transform_2(%arg0: i32, %arg1: i32, %arg2: i32) -> (i32, i32) {
    %c0_i32 = arith.constant 0 : i32
    return %arg0, %arg1 : i32, i32
  }
}

</mosaic_0001>

<llo_original>
// kernel: tpu_custom_call.1
$region0: #{tpu_custom_call.1}
  #allocation0 [shape = 'u32[]', space=smem, size = 0x4, offset = 0x4, fixed_abs, tag = 'smem constant byte address 0x4 - core index']
  #allocation1 [shape = 'u32[144,128]{1,0:T(1,128)}', space=vmem, size = 0x12000, scoped, tag = 'internal scratch']
  #allocation2 [shape = 'f32[512,256]{1,0:T(8,128)}', space=vmem, size = 0x80000, scoped, tag = 'scratch operand']
  %s0 = inlined_call_operand.hbm [shape: f32[512,128], index: 0, kind: input, shape index: {}]
  %s1 = inlined_call_operand.hbm [shape: bf16[128,256], index: 1, kind: input, shape index: {}]
  %s2 = inlined_call_operand.hbm [shape: bf16[512,256], index: 2, kind: output, shape index: {}]
  %s3 = sld [smem:[#allocation0]]
  $region34: #{tpu_custom_call.1} parent=0
    _
  %s5 = ssub.s32 1, %s3
  %s6 = scalar_select 0, %s5, %s3
  $region1: #{tpu_custom_call.1} parent=0
    #allocation3 [shape = 'u8[262144]{0}', space=vmem, size = 0x40000, scoped, tag = 'input window, operand 0, single buffered']
    #allocation4 [shape = 's32[1]{0}', space=sflag, size = 0x4, scoped, tag = 'scoped memory for tpu_custom_call.1']
    #allocation5 [shape = 's32[1]{0}', space=sflag, size = 0x4, scoped, tag = 'scoped memory for tpu_custom_call.1']
    #allocation6 [shape = 'u8[65536]{0}', space=vmem, size = 0x10000, scoped, tag = 'input window, operand 1, single buffered']
    #allocation7 [shape = 's32[1]{0}', space=sflag, size = 0x4, scoped, tag = 'scoped memory for tpu_custom_call.1']
    #allocation8 [shape = 'u8[262144]{0}', space=vmem, size = 0x40000, scoped, tag = 'output window, operand 0, single buffered']
    %7 = vsyncpa [#allocation4], 0
    %8 = vsyncpa [#allocation7], 0
    %9 = vsyncpa [#allocation5], 0
    // Predicated region
    $region2: #{tpu_custom_call.1} parent=1 // pred_check
      _
    $region3: #{tpu_custom_call.1} parent=1 // pred_check_branch
      %11 = sbr.rel (0) target = $region5
    $region4: #{tpu_custom_call.1} parent=1 // pred_region
      %s13 = ssub.s32 8192, 8192
      %14 = vsyncadd [#allocation4], %s13
      %s15 = sshll.u32 [#allocation3], 4
      %s16 = int_to_ptr.vmem [resolvable:$true] %s15
      %21 = dma.hbm_to_vmem [thread:$0]  %s0, 8192, %s16, [#allocation4], 128, 128, 8
    $region5: #{tpu_custom_call.1} parent=1 // pred_fallthru
      _
    // Predicated region
    $region6: #{tpu_custom_call.1} parent=1 // pred_check
      _
    $region7: #{tpu_custom_call.1} parent=1 // pred_check_branch
      %23 = sbr.rel (0) target = $region9
    $region8: #{tpu_custom_call.1} parent=1 // pred_region
      %s25 = ssub.s32 2048, 2048
      %26 = vsyncadd [#allocation7], %s25
      %s27 = sshll.u32 [#allocation6], 4
      %s28 = int_to_ptr.vmem [resolvable:$true] %s27
      %33 = dma.hbm_to_vmem [thread:$0]  %s1, 2048, %s28, [#allocation7], 128, 128, 8
    $region9: #{tpu_custom_call.1} parent=1 // pred_fallthru
      _
    // Predicated region
    $region10: #{tpu_custom_call.1} parent=1 // pred_check
      _
    $region11: #{tpu_custom_call.1} parent=1 // pred_check_branch
      %35 = sbr.rel (0) target = $region13
    $region12: #{tpu_custom_call.1} parent=1 // pred_region
      %36 = dma.done [#allocation4], 8192
    $region13: #{tpu_custom_call.1} parent=1 // pred_fallthru
      _
    // Predicated region
    $region14: #{tpu_custom_call.1} parent=1 // pred_check
      _
    $region15: #{tpu_custom_call.1} parent=1 // pred_check_branch
      %38 = sbr.rel (0) target = $region17
    $region16: #{tpu_custom_call.1} parent=1 // pred_region
      %39 = dma.done [#allocation7], 2048
    $region17: #{tpu_custom_call.1} parent=1 // pred_fallthru
      _
    %p41 = scmp.eq.s32.totalorder 0, 0
    // Predicated region
    $region18: #{tpu_custom_call.1} parent=1 // pred_check
      %p42 = pneg %p41
    $region19: #{tpu_custom_call.1} parent=1 // pred_check_branch
      %44 = sbr.rel (%p42) target = $region21
    $region20: #{tpu_custom_call.1} parent=1 // pred_region
      %45 = vst [vmem:[#allocation2] sm:$0xff] 0.0
      %46 = vst [vmem:[#allocation2 + $0x8] sm:$0xff] 0.0
      %47 = vst [vmem:[#allocation2 + $0x10] sm:$0xff] 0.0
      %48 = vst [vmem:[#allocation2 + $0x18] sm:$0xff] 0.0
      %49 = vst [vmem:[#allocation2 + $0x20] sm:$0xff] 0.0
      %50 = vst [vmem:[#allocation2 + $0x28] sm:$0xff] 0.0
      %51 = vst [vmem:[#allocation2 + $0x30] sm:$0xff] 0.0
      %52 = vst [vmem:[#allocation2 + $0x38] sm:$0xff] 0.0
      %53 = vst [vmem:[#allocation2 + $0x40] sm:$0xff] 0.0
      %54 = vst [vmem:[#allocation2 + $0x48] sm:$0xff] 0.0
      %55 = vst [vmem:[#allocation2 + $0x50] sm:$0xff] 0.0
      %56 = vst [vmem:[#allocation2 + $0x58] sm:$0xff] 0.0
      %57 = vst [vmem:[#allocation2 + $0x60] sm:$0xff] 0.0
      %58 = vst [vmem:[#allocation2 + $0x68] sm:$0xff] 0.0
      %59 = vst [vmem:[#allocation2 + $0x70] sm:$0xff] 0.0
      %60 = vst [vmem:[#allocation2 + $0x78] sm:$0xff] 0.0
      %61 = vst [vmem:[#allocation2 + $0x80] sm:$0xff] 0.0
      %62 = vst [vmem:[#allocation2 + $0x88] sm:$0xff] 0.0
      %63 = vst [vmem:[#allocation2 + $0x90] sm:$0xff] 0.0
      %64 = vst [vmem:[#allocation2 + $0x98] sm:$0xff] 0.0
      %65 = vst [vmem:[#allocation2 + $0xa0] sm:$0xff] 0.0
      %66 = vst [vmem:[#allocation2 + $0xa8] sm:$0xff] 0.0
      %67 = vst [vmem:[#allocation2 + $0xb0] sm:$0xff] 0.0
      %68 = vst [vmem:[#allocation2 + $0xb8] sm:$0xff] 0.0
      %69 = vst [vmem:[#allocation2 + $0xc0] sm:$0xff] 0.0
      %70 = vst [vmem:[#allocation2 + $0xc8] sm:$0xff] 0.0
      %71 = vst [vmem:[#allocation2 + $0xd0] sm:$0xff] 0.0
      %72 = vst [vmem:[#allocation2 + $0xd8] sm:$0xff] 0.0
      %73 = vst [vmem:[#allocation2 + $0xe0] sm:$0xff] 0.0
      %74 = vst [vmem:[#allocation2 + $0xe8] sm:$0xff] 0.0
      %75 = vst [vmem:[#allocation2 + $0xf0] sm:$0xff] 0.0
      %76 = vst [vmem:[#allocation2 + $0xf8] sm:$0xff] 0.0
      %77 = vst [vmem:[#allocation2 + $0x100] sm:$0xff] 0.0
      %78 = vst [vmem:[#allocation2 + $0x108] sm:$0xff] 0.0
      %79 = vst [vmem:[#allocation2 + $0x110] sm:$0xff] 0.0
      %80 = vst [vmem:[#allocation2 + $0x118] sm:$0xff] 0.0
      %81 = vst [vmem:[#allocation2 + $0x120] sm:$0xff] 0.0
      %82 = vst [vmem:[#allocation2 + $0x128] sm:$0xff] 0.0
      %83 = vst [vmem:[#allocation2 + $0x130] sm:$0xff] 0.0
      %84 = vst [vmem:[#allocation2 + $0x138] sm:$0xff] 0.0
      %85 = vst [vmem:[#allocation2 + $0x140] sm:$0xff] 0.0
      %86 = vst [vmem:[#allocation2 + $0x148] sm:$0xff] 0.0
      %87 = vst [vmem:[#allocation2 + $0x150] sm:$0xff] 0.0
      %88 = vst [vmem:[#allocation2 + $0x158] sm:$0xff] 0.0
      %89 = vst [vmem:[#allocation2 + $0x160] sm:$0xff] 0.0
      %90 = vst [vmem:[#allocation2 + $0x168] sm:$0xff] 0.0
      %91 = vst [vmem:[#allocation2 + $0x170] sm:$0xff] 0.0
      %92 = vst [vmem:[#allocation2 + $0x178] sm:$0xff] 0.0
      %93 = vst [vmem:[#allocation2 + $0x180] sm:$0xff] 0.0
      %94 = vst [vmem:[#allocation2 + $0x188] sm:$0xff] 0.0
      %95 = vst [vmem:[#allocation2 + $0x190] sm:$0xff] 0.0
      %96 = vst [vmem:[#allocation2 + $0x198] sm:$0xff] 0.0
      %97 = vst [vmem:[#allocation2 + $0x1a0] sm:$0xff] 0.0
      %98 = vst [vmem:[#allocation2 + $0x1a8] sm:$0xff] 0.0
      %99 = vst [vmem:[#allocation2 + $0x1b0] sm:$0xff] 0.0
      %100 = vst [vmem:[#allocation2 + $0x1b8] sm:$0xff] 0.0
      %101 = vst [vmem:[#allocation2 + $0x1c0] sm:$0xff] 0.0
      %102 = vst [vmem:[#allocation2 + $0x1c8] sm:$0xff] 0.0
      %103 = vst [vmem:[#allocation2 + $0x1d0] sm:$0xff] 0.0
      %104 = vst [vmem:[#allocation2 + $0x1d8] sm:$0xff] 0.0
      %105 = vst [vmem:[#allocation2 + $0x1e0] sm:$0xff] 0.0
      %106 = vst [vmem:[#allocation2 + $0x1e8] sm:$0xff] 0.0
      %107 = vst [vmem:[#allocation2 + $0x1f0] sm:$0xff] 0.0
      %108 = vst [vmem:[#allocation2 + $0x1f8] sm:$0xff] 0.0
      %109 = vst [vmem:[#allocation2 + $0x200] sm:$0xff] 0.0
      %110 = vst [vmem:[#allocation2 + $0x208] sm:$0xff] 0.0
      %111 = vst [vmem:[#allocation2 + $0x210] sm:$0xff] 0.0
      %112 = vst [vmem:[#allocation2 + $0x218] sm:$0xff] 0.0
      %113 = vst [vmem:[#allocation2 + $0x220] sm:$0xff] 0.0
      %114 = vst [vmem:[#allocation2 + $0x228] sm:$0xff] 0.0
      %115 = vst [vmem:[#allocation2 + $0x230] sm:$0xff] 0.0
      %116 = vst [vmem:[#allocation2 + $0x238] sm:$0xff] 0.0
      %117 = vst [vmem:[#allocation2 + $0x240] sm:$0xff] 0.0
      %118 = vst [vmem:[#allocation2 + $0x248] sm:$0xff] 0.0
      %119 = vst [vmem:[#allocation2 + $0x250] sm:$0xff] 0.0
      %120 = vst [vmem:[#allocation2 + $0x258] sm:$0xff] 0.0
      %121 = vst [vmem:[#allocation2 + $0x260] sm:$0xff] 0.0
      %122 = vst [vmem:[#allocation2 + $0x268] sm:$0xff] 0.0
      %123 = vst [vmem:[#allocation2 + $0x270] sm:$0xff] 0.0
      %124 = vst [vmem:[#allocation2 + $0x278] sm:$0xff] 0.0
      %125 = vst [vmem:[#allocation2 + $0x280] sm:$0xff] 0.0
      %126 = vst [vmem:[#allocation2 + $0x288] sm:$0xff] 0.0
      %127 = vst [vmem:[#allocation2 + $0x290] sm:$0xff] 0.0
      %128 = vst [vmem:[#allocation2 + $0x298] sm:$0xff] 0.0
      %129 = vst [vmem:[#allocation2 + $0x2a0] sm:$0xff] 0.0
      %130 = vst [vmem:[#allocation2 + $0x2a8] sm:$0xff] 0.0
      %131 = vst [vmem:[#allocation2 + $0x2b0] sm:$0xff] 0.0
      %132 = vst [vmem:[#allocation2 + $0x2b8] sm:$0xff] 0.0
      %133 = vst [vmem:[#allocation2 + $0x2c0] sm:$0xff] 0.0
      %134 = vst [vmem:[#allocation2 + $0x2c8] sm:$0xff] 0.0
      %135 = vst [vmem:[#allocation2 + $0x2d0] sm:$0xff] 0.0
      %136 = vst [vmem:[#allocation2 + $0x2d8] sm:$0xff] 0.0
      %137 = vst [vmem:[#allocation2 + $0x2e0] sm:$0xff] 0.0
      %138 = vst [vmem:[#allocation2 + $0x2e8] sm:$0xff] 0.0
      %139 = vst [vmem:[#allocation2 + $0x2f0] sm:$0xff] 0.0
      %140 = vst [vmem:[#allocation2 + $0x2f8] sm:$0xff] 0.0
      %141 = vst [vmem:[#allocation2 + $0x300] sm:$0xff] 0.0
      %142 = vst [vmem:[#allocation2 + $0x308] sm:$0xff] 0.0
      %143 = vst [vmem:[#allocation2 + $0x310] sm:$0xff] 0.0
      %144 = vst [vmem:[#allocation2 + $0x318] sm:$0xff] 0.0
      %145 = vst [vmem:[#allocation2 + $0x320] sm:$0xff] 0.0
      %146 = vst [vmem:[#allocation2 + $0x328] sm:$0xff] 0.0
      %147 = vst [vmem:[#allocation2 + $0x330] sm:$0xff] 0.0
      %148 = vst [vmem:[#allocation2 + $0x338] sm:$0xff] 0.0
      %149 = vst [vmem:[#allocation2 + $0x340] sm:$0xff] 0.0
      %150 = vst [vmem:[#allocation2 + $0x348] sm:$0xff] 0.0
      %151 = vst [vmem:[#allocation2 + $0x350] sm:$0xff] 0.0
      %152 = vst [vmem:[#allocation2 + $0x358] sm:$0xff] 0.0
      %153 = vst [vmem:[#allocation2 + $0x360] sm:$0xff] 0.0
      %154 = vst [vmem:[#allocation2 + $0x368] sm:$0xff] 0.0
      %155 = vst [vmem:[#allocation2 + $0x370] sm:$0xff] 0.0
      %156 = vst [vmem:[#allocation2 + $0x378] sm:$0xff] 0.0
      %157 = vst [vmem:[#allocation2 + $0x380] sm:$0xff] 0.0
      %158 = vst [vmem:[#allocation2 + $0x388] sm:$0xff] 0.0
      %159 = vst [vmem:[#allocation2 + $0x390] sm:$0xff] 0.0
      %160 = vst [vmem:[#allocation2 + $0x398] sm:$0xff] 0.0
      %161 = vst [vmem:[#allocation2 + $0x3a0] sm:$0xff] 0.0
      %162 = vst [vmem:[#allocation2 + $0x3a8] sm:$0xff] 0.0
      %163 = vst [vmem:[#allocation2 + $0x3b0] sm:$0xff] 0.0
      %164 = vst [vmem:[#allocation2 + $0x3b8] sm:$0xff] 0.0
      %165 = vst [vmem:[#allocation2 + $0x3c0] sm:$0xff] 0.0
      %166 = vst [vmem:[#allocation2 + $0x3c8] sm:$0xff] 0.0
      %167 = vst [vmem:[#allocation2 + $0x3d0] sm:$0xff] 0.0
      %168 = vst [vmem:[#allocation2 + $0x3d8] sm:$0xff] 0.0
      %169 = vst [vmem:[#allocation2 + $0x3e0] sm:$0xff] 0.0
      %170 = vst [vmem:[#allocation2 + $0x3e8] sm:$0xff] 0.0
      %171 = vst [vmem:[#allocation2 + $0x3f0] sm:$0xff] 0.0
      %172 = vst [vmem:[#allocation2 + $0x3f8] sm:$0xff] 0.0
    $region21: #{tpu_custom_call.1} parent=1 // pred_fallthru
      _
    %v173 = vld [vmem:[#allocation2] sm:$0xff]
    %v174 = vld [vmem:[#allocation2 + $0x8] sm:$0xff]
    %v175 = vld [vmem:[#allocation2 + $0x10] sm:$0xff]
    %v176 = vld [vmem:[#allocation2 + $0x18] sm:$0xff]
    %v177 = vld [vmem:[#allocation2 + $0x20] sm:$0xff]
    %v178 = vld [vmem:[#allocation2 + $0x28] sm:$0xff]
    %v179 = vld [vmem:[#allocation2 + $0x30] sm:$0xff]
    %v180 = vld [vmem:[#allocation2 + $0x38] sm:$0xff]
    %v181 = vld [vmem:[#allocation2 + $0x40] sm:$0xff]
    %v182 = vld [vmem:[#allocation2 + $0x48] sm:$0xff]
    %v183 = vld [vmem:[#allocation2 + $0x50] sm:$0xff]
    %v184 = vld [vmem:[#allocation2 + $0x58] sm:$0xff]
    %v185 = vld [vmem:[#allocation2 + $0x60] sm:$0xff]
    %v186 = vld [vmem:[#allocation2 + $0x68] sm:$0xff]
    %v187 = vld [vmem:[#allocation2 + $0x70] sm:$0xff]
    %v188 = vld [vmem:[#allocation2 + $0x78] sm:$0xff]
    %v189 = vld [vmem:[#allocation2 + $0x80] sm:$0xff]
    %v190 = vld [vmem:[#allocation2 + $0x88] sm:$0xff]
    %v191 = vld [vmem:[#allocation2 + $0x90] sm:$0xff]
    %v192 = vld [vmem:[#allocation2 + $0x98] sm:$0xff]
    %v193 = vld [vmem:[#allocation2 + $0xa0] sm:$0xff]
    %v194 = vld [vmem:[#allocation2 + $0xa8] sm:$0xff]
    %v195 = vld [vmem:[#allocation2 + $0xb0] sm:$0xff]
    %v196 = vld [vmem:[#allocation2 + $0xb8] sm:$0xff]
    %v197 = vld [vmem:[#allocation2 + $0xc0] sm:$0xff]
    %v198 = vld [vmem:[#allocation2 + $0xc8] sm:$0xff]
    %v199 = vld [vmem:[#allocation2 + $0xd0] sm:$0xff]
    %v200 = vld [vmem:[#allocation2 + $0xd8] sm:$0xff]
    %v201 = vld [vmem:[#allocation2 + $0xe0] sm:$0xff]
    %v202 = vld [vmem:[#allocation2 + $0xe8] sm:$0xff]
    %v203 = vld [vmem:[#allocation2 + $0xf0] sm:$0xff]
    %v204 = vld [vmem:[#allocation2 + $0xf8] sm:$0xff]
    %v205 = vld [vmem:[#allocation2 + $0x100] sm:$0xff]
    %v206 = vld [vmem:[#allocation2 + $0x108] sm:$0xff]
    %v207 = vld [vmem:[#allocation2 + $0x110] sm:$0xff]
    %v208 = vld [vmem:[#allocation2 + $0x118] sm:$0xff]
    %v209 = vld [vmem:[#allocation2 + $0x120] sm:$0xff]
    %v210 = vld [vmem:[#allocation2 + $0x128] sm:$0xff]
    %v211 = vld [vmem:[#allocation2 + $0x130] sm:$0xff]
    %v212 = vld [vmem:[#allocation2 + $0x138] sm:$0xff]
    %v213 = vld [vmem:[#allocation2 + $0x140] sm:$0xff]
    %v214 = vld [vmem:[#allocation2 + $0x148] sm:$0xff]
    %v215 = vld [vmem:[#allocation2 + $0x150] sm:$0xff]
    %v216 = vld [vmem:[#allocation2 + $0x158] sm:$0xff]
    %v217 = vld [vmem:[#allocation2 + $0x160] sm:$0xff]
    %v218 = vld [vmem:[#allocation2 + $0x168] sm:$0xff]
    %v219 = vld [vmem:[#allocation2 + $0x170] sm:$0xff]
    %v220 = vld [vmem:[#allocation2 + $0x178] sm:$0xff]
    %v221 = vld [vmem:[#allocation2 + $0x180] sm:$0xff]
    %v222 = vld [vmem:[#allocation2 + $0x188] sm:$0xff]
    %v223 = vld [vmem:[#allocation2 + $0x190] sm:$0xff]
    %v224 = vld [vmem:[#allocation2 + $0x198] sm:$0xff]
    %v225 = vld [vmem:[#allocation2 + $0x1a0] sm:$0xff]
    %v226 = vld [vmem:[#allocation2 + $0x1a8] sm:$0xff]
    %v227 = vld [vmem:[#allocation2 + $0x1b0] sm:$0xff]
    %v228 = vld [vmem:[#allocation2 + $0x1b8] sm:$0xff]
    %v229 = vld [vmem:[#allocation2 + $0x1c0] sm:$0xff]
    %v230 = vld [vmem:[#allocation2 + $0x1c8] sm:$0xff]
    %v231 = vld [vmem:[#allocation2 + $0x1d0] sm:$0xff]
    %v232 = vld [vmem:[#allocation2 + $0x1d8] sm:$0xff]
    %v233 = vld [vmem:[#allocation2 + $0x1e0] sm:$0xff]
    %v234 = vld [vmem:[#allocation2 + $0x1e8] sm:$0xff]
    %v235 = vld [vmem:[#allocation2 + $0x1f0] sm:$0xff]
    %v236 = vld [vmem:[#allocation2 + $0x1f8] sm:$0xff]
    %v237 = vld [vmem:[#allocation2 + $0x200] sm:$0xff]
    %v238 = vld [vmem:[#allocation2 + $0x208] sm:$0xff]
    %v239 = vld [vmem:[#allocation2 + $0x210] sm:$0xff]
    %v240 = vld [vmem:[#allocation2 + $0x218] sm:$0xff]
    %v241 = vld [vmem:[#allocation2 + $0x220] sm:$0xff]
    %v242 = vld [vmem:[#allocation2 + $0x228] sm:$0xff]
    %v243 = vld [vmem:[#allocation2 + $0x230] sm:$0xff]
    %v244 = vld [vmem:[#allocation2 + $0x238] sm:$0xff]
    %v245 = vld [vmem:[#allocation2 + $0x240] sm:$0xff]
    %v246 = vld [vmem:[#allocation2 + $0x248] sm:$0xff]
    %v247 = vld [vmem:[#allocation2 + $0x250] sm:$0xff]
    %v248 = vld [vmem:[#allocation2 + $0x258] sm:$0xff]
    %v249 = vld [vmem:[#allocation2 + $0x260] sm:$0xff]
    %v250 = vld [vmem:[#allocation2 + $0x268] sm:$0xff]
    %v251 = vld [vmem:[#allocation2 + $0x270] sm:$0xff]
    %v252 = vld [vmem:[#allocation2 + $0x278] sm:$0xff]
    %v253 = vld [vmem:[#allocation2 + $0x280] sm:$0xff]
    %v254 = vld [vmem:[#allocation2 + $0x288] sm:$0xff]
    %v255 = vld [vmem:[#allocation2 + $0x290] sm:$0xff]
    %v256 = vld [vmem:[#allocation2 + $0x298] sm:$0xff]
    %v257 = vld [vmem:[#allocation2 + $0x2a0] sm:$0xff]
    %v258 = vld [vmem:[#allocation2 + $0x2a8] sm:$0xff]
    %v259 = vld [vmem:[#allocation2 + $0x2b0] sm:$0xff]
    %v260 = vld [vmem:[#allocation2 + $0x2b8] sm:$0xff]
    %v261 = vld [vmem:[#allocation2 + $0x2c0] sm:$0xff]
    %v262 = vld [vmem:[#allocation2 + $0x2c8] sm:$0xff]
    %v263 = vld [vmem:[#allocation2 + $0x2d0] sm:$0xff]
    %v264 = vld [vmem:[#allocation2 + $0x2d8] sm:$0xff]
    %v265 = vld [vmem:[#allocation2 + $0x2e0] sm:$0xff]
    %v266 = vld [vmem:[#allocation2 + $0x2e8] sm:$0xff]
    %v267 = vld [vmem:[#allocation2 + $0x2f0] sm:$0xff]
    %v268 = vld [vmem:[#allocation2 + $0x2f8] sm:$0xff]
    %v269 = vld [vmem:[#allocation2 + $0x300] sm:$0xff]
    %v270 = vld [vmem:[#allocation2 + $0x308] sm:$0xff]
    %v271 = vld [vmem:[#allocation2 + $0x310] sm:$0xff]
    %v272 = vld [vmem:[#allocation2 + $0x318] sm:$0xff]
    %v273 = vld [vmem:[#allocation2 + $0x320] sm:$0xff]
    %v274 = vld [vmem:[#allocation2 + $0x328] sm:$0xff]
    %v275 = vld [vmem:[#allocation2 + $0x330] sm:$0xff]
    %v276 = vld [vmem:[#allocation2 + $0x338] sm:$0xff]
    %v277 = vld [vmem:[#allocation2 + $0x340] sm:$0xff]
    %v278 = vld [vmem:[#allocation2 + $0x348] sm:$0xff]
    %v279 = vld [vmem:[#allocation2 + $0x350] sm:$0xff]
    %v280 = vld [vmem:[#allocation2 + $0x358] sm:$0xff]
    %v281 = vld [vmem:[#allocation2 + $0x360] sm:$0xff]
    %v282 = vld [vmem:[#allocation2 + $0x368] sm:$0xff]
    %v283 = vld [vmem:[#allocation2 + $0x370] sm:$0xff]
    %v284 = vld [vmem:[#allocation2 + $0x378] sm:$0xff]
    %v285 = vld [vmem:[#allocation2 + $0x380] sm:$0xff]
    %v286 = vld [vmem:[#allocation2 + $0x388] sm:$0xff]
    %v287 = vld [vmem:[#allocation2 + $0x390] sm:$0xff]
    %v288 = vld [vmem:[#allocation2 + $0x398] sm:$0xff]
    %v289 = vld [vmem:[#allocation2 + $0x3a0] sm:$0xff]
    %v290 = vld [vmem:[#allocation2 + $0x3a8] sm:$0xff]
    %v291 = vld [vmem:[#allocation2 + $0x3b0] sm:$0xff]
    %v292 = vld [vmem:[#allocation2 + $0x3b8] sm:$0xff]
    %v293 = vld [vmem:[#allocation2 + $0x3c0] sm:$0xff]
    %v294 = vld [vmem:[#allocation2 + $0x3c8] sm:$0xff]
    %v295 = vld [vmem:[#allocation2 + $0x3d0] sm:$0xff]
    %v296 = vld [vmem:[#allocation2 + $0x3d8] sm:$0xff]
    %v297 = vld [vmem:[#allocation2 + $0x3e0] sm:$0xff]
    %v298 = vld [vmem:[#allocation2 + $0x3e8] sm:$0xff]
    %v299 = vld [vmem:[#allocation2 + $0x3f0] sm:$0xff]
    %v300 = vld [vmem:[#allocation2 + $0x3f8] sm:$0xff]
    %v301 = vld [vmem:[#allocation3] sm:$0xff]
    %v302 = vld [vmem:[#allocation3 + $0x8] sm:$0xff]
    %v303 = vld [vmem:[#allocation3 + $0x10] sm:$0xff]
    %v304 = vld [vmem:[#allocation3 + $0x18] sm:$0xff]
    %v305 = vld [vmem:[#allocation3 + $0x20] sm:$0xff]
    %v306 = vld [vmem:[#allocation3 + $0x28] sm:$0xff]
    %v307 = vld [vmem:[#allocation3 + $0x30] sm:$0xff]
    %v308 = vld [vmem:[#allocation3 + $0x38] sm:$0xff]
    %v309 = vld [vmem:[#allocation3 + $0x40] sm:$0xff]
    %v310 = vld [vmem:[#allocation3 + $0x48] sm:$0xff]
    %v311 = vld [vmem:[#allocation3 + $0x50] sm:$0xff]
    %v312 = vld [vmem:[#allocation3 + $0x58] sm:$0xff]
    %v313 = vld [vmem:[#allocation3 + $0x60] sm:$0xff]
    %v314 = vld [vmem:[#allocation3 + $0x68] sm:$0xff]
    %v315 = vld [vmem:[#allocation3 + $0x70] sm:$0xff]
    %v316 = vld [vmem:[#allocation3 + $0x78] sm:$0xff]
    %v317 = vld [vmem:[#allocation3 + $0x80] sm:$0xff]
    %v318 = vld [vmem:[#allocation3 + $0x88] sm:$0xff]
    %v319 = vld [vmem:[#allocation3 + $0x90] sm:$0xff]
    %v320 = vld [vmem:[#allocation3 + $0x98] sm:$0xff]
    %v321 = vld [vmem:[#allocation3 + $0xa0] sm:$0xff]
    %v322 = vld [vmem:[#allocation3 + $0xa8] sm:$0xff]
    %v323 = vld [vmem:[#allocation3 + $0xb0] sm:$0xff]
    %v324 = vld [vmem:[#allocation3 + $0xb8] sm:$0xff]
    %v325 = vld [vmem:[#allocation3 + $0xc0] sm:$0xff]
    %v326 = vld [vmem:[#allocation3 + $0xc8] sm:$0xff]
    %v327 = vld [vmem:[#allocation3 + $0xd0] sm:$0xff]
    %v328 = vld [vmem:[#allocation3 + $0xd8] sm:$0xff]
    %v329 = vld [vmem:[#allocation3 + $0xe0] sm:$0xff]
    %v330 = vld [vmem:[#allocation3 + $0xe8] sm:$0xff]
    %v331 = vld [vmem:[#allocation3 + $0xf0] sm:$0xff]
    %v332 = vld [vmem:[#allocation3 + $0xf8] sm:$0xff]
    %v333 = vld [vmem:[#allocation3 + $0x100] sm:$0xff]
    %v334 = vld [vmem:[#allocation3 + $0x108] sm:$0xff]
    %v335 = vld [vmem:[#allocation3 + $0x110] sm:$0xff]
    %v336 = vld [vmem:[#allocation3 + $0x118] sm:$0xff]
    %v337 = vld [vmem:[#allocation3 + $0x120] sm:$0xff]
    %v338 = vld [vmem:[#allocation3 + $0x128] sm:$0xff]
    %v339 = vld [vmem:[#allocation3 + $0x130] sm:$0xff]
    %v340 = vld [vmem:[#allocation3 + $0x138] sm:$0xff]
    %v341 = vld [vmem:[#allocation3 + $0x140] sm:$0xff]
    %v342 = vld [vmem:[#allocation3 + $0x148] sm:$0xff]
    %v343 = vld [vmem:[#allocation3 + $0x150] sm:$0xff]
    %v344 = vld [vmem:[#allocation3 + $0x158] sm:$0xff]
    %v345 = vld [vmem:[#allocation3 + $0x160] sm:$0xff]
    %v346 = vld [vmem:[#allocation3 + $0x168] sm:$0xff]
    %v347 = vld [vmem:[#allocation3 + $0x170] sm:$0xff]
    %v348 = vld [vmem:[#allocation3 + $0x178] sm:$0xff]
    %v349 = vld [vmem:[#allocation3 + $0x180] sm:$0xff]
    %v350 = vld [vmem:[#allocation3 + $0x188] sm:$0xff]
    %v351 = vld [vmem:[#allocation3 + $0x190] sm:$0xff]
    %v352 = vld [vmem:[#allocation3 + $0x198] sm:$0xff]
    %v353 = vld [vmem:[#allocation3 + $0x1a0] sm:$0xff]
    %v354 = vld [vmem:[#allocation3 + $0x1a8] sm:$0xff]
    %v355 = vld [vmem:[#allocation3 + $0x1b0] sm:$0xff]
    %v356 = vld [vmem:[#allocation3 + $0x1b8] sm:$0xff]
    %v357 = vld [vmem:[#allocation3 + $0x1c0] sm:$0xff]
    %v358 = vld [vmem:[#allocation3 + $0x1c8] sm:$0xff]
    %v359 = vld [vmem:[#allocation3 + $0x1d0] sm:$0xff]
    %v360 = vld [vmem:[#allocation3 + $0x1d8] sm:$0xff]
    %v361 = vld [vmem:[#allocation3 + $0x1e0] sm:$0xff]
    %v362 = vld [vmem:[#allocation3 + $0x1e8] sm:$0xff]
    %v363 = vld [vmem:[#allocation3 + $0x1f0] sm:$0xff]
    %v364 = vld [vmem:[#allocation3 + $0x1f8] sm:$0xff]
    %v365 = vpack.c.bf16 %v302, %v301
    %v366 = vpack.c.bf16 %v304, %v303
    %v367 = vpack.c.bf16 %v306, %v305
    %v368 = vpack.c.bf16 %v308, %v307
    %v369 = vpack.c.bf16 %v310, %v309
    %v370 = vpack.c.bf16 %v312, %v311
    %v371 = vpack.c.bf16 %v314, %v313
    %v372 = vpack.c.bf16 %v316, %v315
    %v373 = vpack.c.bf16 %v318, %v317
    %v374 = vpack.c.bf16 %v320, %v319
    %v375 = vpack.c.bf16 %v322, %v321
    %v376 = vpack.c.bf16 %v324, %v323
    %v377 = vpack.c.bf16 %v326, %v325
    %v378 = vpack.c.bf16 %v328, %v327
    %v379 = vpack.c.bf16 %v330, %v329
    %v380 = vpack.c.bf16 %v332, %v331
    %v381 = vpack.c.bf16 %v334, %v333
    %v382 = vpack.c.bf16 %v336, %v335
    %v383 = vpack.c.bf16 %v338, %v337
    %v384 = vpack.c.bf16 %v340, %v339
    %v385 = vpack.c.bf16 %v342, %v341
    %v386 = vpack.c.bf16 %v344, %v343
    %v387 = vpack.c.bf16 %v346, %v345
    %v388 = vpack.c.bf16 %v348, %v347
    %v389 = vpack.c.bf16 %v350, %v349
    %v390 = vpack.c.bf16 %v352, %v351
    %v391 = vpack.c.bf16 %v354, %v353
    %v392 = vpack.c.bf16 %v356, %v355
    %v393 = vpack.c.bf16 %v358, %v357
    %v394 = vpack.c.bf16 %v360, %v359
    %v395 = vpack.c.bf16 %v362, %v361
    %v396 = vpack.c.bf16 %v364, %v363
    %v397 = vld [vmem:[#allocation6] sm:$0xff]
    %v398 = vld [vmem:[#allocation6 + $0x8] sm:$0xff]
    %v399 = vld [vmem:[#allocation6 + $0x10] sm:$0xff]
    %v400 = vld [vmem:[#allocation6 + $0x18] sm:$0xff]
    %v401 = vld [vmem:[#allocation6 + $0x20] sm:$0xff]
    %v402 = vld [vmem:[#allocation6 + $0x28] sm:$0xff]
    %v403 = vld [vmem:[#allocation6 + $0x30] sm:$0xff]
    %v404 = vld [vmem:[#allocation6 + $0x38] sm:$0xff]
    %v405 = vld [vmem:[#allocation6 + $0x40] sm:$0xff]
    %v406 = vld [vmem:[#allocation6 + $0x48] sm:$0xff]
    %v407 = vld [vmem:[#allocation6 + $0x50] sm:$0xff]
    %v408 = vld [vmem:[#allocation6 + $0x58] sm:$0xff]
    %v409 = vld [vmem:[#allocation6 + $0x60] sm:$0xff]
    %v410 = vld [vmem:[#allocation6 + $0x68] sm:$0xff]
    %v411 = vld [vmem:[#allocation6 + $0x70] sm:$0xff]
    %v412 = vld [vmem:[#allocation6 + $0x78] sm:$0xff]
    %v429 = vunpack.c.l.b16 %v397
    %v430 = vunpack.c.h.b16 %v397
    %v431 = vunpack.c.l.b16 %v398
    %v432 = vunpack.c.h.b16 %v398
    %v433 = vunpack.c.l.b16 %v399
    %v434 = vunpack.c.h.b16 %v399
    %v435 = vunpack.c.l.b16 %v400
    %v436 = vunpack.c.h.b16 %v400
    %v437 = vunpack.c.l.b16 %v401
    %v438 = vunpack.c.h.b16 %v401
    %v439 = vunpack.c.l.b16 %v402
    %v440 = vunpack.c.h.b16 %v402
    %v441 = vunpack.c.l.b16 %v403
    %v442 = vunpack.c.h.b16 %v403
    %v443 = vunpack.c.l.b16 %v404
    %v444 = vunpack.c.h.b16 %v404
    %v445 = vunpack.c.l.b16 %v405
    %v446 = vunpack.c.h.b16 %v405
    %v447 = vunpack.c.l.b16 %v406
    %v448 = vunpack.c.h.b16 %v406
    %v449 = vunpack.c.l.b16 %v407
    %v450 = vunpack.c.h.b16 %v407
    %v451 = vunpack.c.l.b16 %v408
    %v452 = vunpack.c.h.b16 %v408
    %v453 = vunpack.c.l.b16 %v409
    %v454 = vunpack.c.h.b16 %v409
    %v455 = vunpack.c.l.b16 %v410
    %v456 = vunpack.c.h.b16 %v410
    %v457 = vunpack.c.l.b16 %v411
    %v458 = vunpack.c.h.b16 %v411
    %v459 = vunpack.c.l.b16 %v412
    %v460 = vunpack.c.h.b16 %v412
    %v461 = vpack.c.b16 %v431, %v429
    %v462 = vpack.c.b16 %v432, %v430
    %v463 = vpack.c.b16 %v435, %v433
    %v464 = vpack.c.b16 %v436, %v434
    %v465 = vpack.c.b16 %v439, %v437
    %v466 = vpack.c.b16 %v440, %v438
    %v467 = vpack.c.b16 %v443, %v441
    %v468 = vpack.c.b16 %v444, %v442
    %v469 = vpack.c.b16 %v447, %v445
    %v470 = vpack.c.b16 %v448, %v446
    %v471 = vpack.c.b16 %v451, %v449
    %v472 = vpack.c.b16 %v452, %v450
    %v473 = vpack.c.b16 %v455, %v453
    %v474 = vpack.c.b16 %v456, %v454
    %v475 = vpack.c.b16 %v459, %v457
    %v476 = vpack.c.b16 %v460, %v458
    %493 = vmatprep.subr.bf16.mxu0 %v462
    %494 = vmatpush1.bf16.msra.mxu0 %v461
    %495 = vmatprep.subr.bf16.mxu0 %v464
    %496 = vmatpush1.bf16.msra.mxu0 %v463
    %497 = vmatprep.subr.bf16.mxu0 %v466
    %498 = vmatpush1.bf16.msra.mxu0 %v465
    %499 = vmatprep.subr.bf16.mxu0 %v468
    %500 = vmatpush1.bf16.msra.mxu0 %v467
    %501 = vmatprep.subr.bf16.mxu0 %v470
    %502 = vmatpush1.bf16.msra.mxu0 %v469
    %503 = vmatprep.subr.bf16.mxu0 %v472
    %504 = vmatpush1.bf16.msra.mxu0 %v471
    %505 = vmatprep.subr.bf16.mxu0 %v474
    %506 = vmatpush1.bf16.msra.mxu0 %v473
    %507 = vmatprep.subr.bf16.mxu0 %v476
    %508 = vmatpush1.bf16.msra.mxu0 %v475
    %509 = vmatprep.subr.bf16.mxu0 0
    %510 = vmatpush1.bf16.msra.mxu0 0
    %511 = vmatprep.subr.bf16.mxu0 0
    %512 = vmatpush1.bf16.msra.mxu0 0
    %513 = vmatprep.subr.bf16.mxu0 0
    %514 = vmatpush1.bf16.msra.mxu0 0
    %515 = vmatprep.subr.bf16.mxu0 0
    %516 = vmatpush1.bf16.msra.mxu0 0
    %517 = vmatprep.subr.bf16.mxu0 0
    %518 = vmatpush1.bf16.msra.mxu0 0
    %519 = vmatprep.subr.bf16.mxu0 0
    %520 = vmatpush1.bf16.msra.mxu0 0
    %521 = vmatprep.subr.bf16.mxu0 0
    %522 = vmatpush1.bf16.msra.mxu0 0
    %523 = vmatprep.subr.bf16.mxu0 0
    %524 = vmatpush1.bf16.msra.mxu0 0
    %525 = vmatprep.mubr.bf16.mxu0 0
    %526 = vmatmul.mubr.bf16.gmra.mrb[0].mxu0 %v365
    %v527 = vpop.f32.mrb[0].mxu0
    %v528 = vadd.f32 0.0, %v527
    %v529 = vpop.f32.mrb[0].mxu0
    %v530 = vadd.f32 0.0, %v529
    %v531 = vpop.f32.mrb[0].mxu0
    %v532 = vadd.f32 0.0, %v531
    %v533 = vpop.f32.mrb[0].mxu0
    %v534 = vadd.f32 0.0, %v533
    %535 = vmatprep.mubr.bf16.mxu0 0
    %536 = vmatmul.mubr.bf16.gmra.mrb[0].mxu0 %v366
    %v537 = vpop.f32.mrb[0].mxu0
    %v538 = vadd.f32 0.0, %v537
    %v539 = vpop.f32.mrb[0].mxu0
    %v540 = vadd.f32 0.0, %v539
    %v541 = vpop.f32.mrb[0].mxu0
    %v542 = vadd.f32 0.0, %v541
    %v543 = vpop.f32.mrb[0].mxu0
    %v544 = vadd.f32 0.0, %v543
    %545 = vmatprep.mubr.bf16.mxu0 0
    %546 = vmatmul.mubr.bf16.gmra.mrb[0].mxu0 %v367
    %v547 = vpop.f32.mrb[0].mxu0
    %v548 = vadd.f32 0.0, %v547
    %v549 = vpop.f32.mrb[0].mxu0
    %v550 = vadd.f32 0.0, %v549
    %v551 = vpop.f32.mrb[0].mxu0
    %v552 = vadd.f32 0.0, %v551
    %v553 = vpop.f32.mrb[0].mxu0
    %v554 = vadd.f32 0.0, %v553
    %555 = vmatprep.mubr.bf16.mxu0 0
    %556 = vmatmul.mubr.bf16.gmra.mrb[0].mxu0 %v368
    %v557 = vpop.f32.mrb[0].mxu0
    %v558 = vadd.f32 0.0, %v557
    %v559 = vpop.f32.mrb[0].mxu0
    %v560 = vadd.f32 0.0, %v559
    %v561 = vpop.f32.mrb[0].mxu0
    %v562 = vadd.f32 0.0, %v561
    %v563 = vpop.f32.mrb[0].mxu0
    %v564 = vadd.f32 0.0, %v563
    %565 = vmatprep.mubr.bf16.mxu0 0
    %566 = vmatmul.mubr.bf16.gmra.mrb[0].mxu0 %v369
    %v567 = vpop.f32.mrb[0].mxu0
    %v568 = vadd.f32 0.0, %v567
    %v569 = vpop.f32.mrb[0].mxu0
    %v570 = vadd.f32 0.0, %v569
    %v571 = vpop.f32.mrb[0].mxu0
    %v572 = vadd.f32 0.0, %v571
    %v573 = vpop.f32.mrb[0].mxu0
    %v574 = vadd.f32 0.0, %v573
    %575 = vmatprep.mubr.bf16.mxu0 0
    %576 = vmatmul.mubr.bf16.gmra.mrb[0].mxu0 %v370
    %v577 = vpop.f32.mrb[0].mxu0
    %v578 = vadd.f32 0.0, %v577
    %v579 = vpop.f32.mrb[0].mxu0
    %v580 = vadd.f32 0.0, %v579
    %v581 = vpop.f32.mrb[0].mxu0
    %v582 = vadd.f32 0.0, %v581
    %v583 = vpop.f32.mrb[0].mxu0
    %v584 = vadd.f32 0.0, %v583
    %585 = vmatprep.mubr.bf16.mxu0 0
    %586 = vmatmul.mubr.bf16.gmra.mrb[0].mxu0 %v371
    %v587 = vpop.f32.mrb[0].mxu0
    %v588 = vadd.f32 0.0, %v587
    %v589 = vpop.f32.mrb[0].mxu0
    %v590 = vadd.f32 0.0, %v589
    %v591 = vpop.f32.mrb[0].mxu0
    %v592 = vadd.f32 0.0, %v591
    %v593 = vpop.f32.mrb[0].mxu0
    %v594 = vadd.f32 0.0, %v593
    %595 = vmatprep.mubr.bf16.mxu0 0
    %596 = vmatmul.mubr.bf16.gmra.mrb[0].mxu0 %v372
    %v597 = vpop.f32.mrb[0].mxu0
    %v598 = vadd.f32 0.0, %v597
    %v599 = vpop.f32.mrb[0].mxu0
    %v600 = vadd.f32 0.0, %v599
    %v601 = vpop.f32.mrb[0].mxu0
    %v602 = vadd.f32 0.0, %v601
    %v603 = vpop.f32.mrb[0].mxu0
    %v604 = vadd.f32 0.0, %v603
    %605 = vmatprep.mubr.bf16.mxu0 0
    %606 = vmatmul.mubr.bf16.gmra.mrb[0].mxu0 %v373
    %v607 = vpop.f32.mrb[0].mxu0
    %v608 = vadd.f32 0.0, %v607
    %v609 = vpop.f32.mrb[0].mxu0
    %v610 = vadd.f32 0.0, %v609
    %v611 = vpop.f32.mrb[0].mxu0
    %v612 = vadd.f32 0.0, %v611
    %v613 = vpop.f32.mrb[0].mxu0
    %v614 = vadd.f32 0.0, %v613
    %615 = vmatprep.mubr.bf16.mxu0 0
    %616 = vmatmul.mubr.bf16.gmra.mrb[0].mxu0 %v374
    %v617 = vpop.f32.mrb[0].mxu0
    %v618 = vadd.f32 0.0, %v617
    %v619 = vpop.f32.mrb[0].mxu0
    %v620 = vadd.f32 0.0, %v619
    %v621 = vpop.f32.mrb[0].mxu0
    %v622 = vadd.f32 0.0, %v621
    %v623 = vpop.f32.mrb[0].mxu0
    %v624 = vadd.f32 0.0, %v623
    %625 = vmatprep.mubr.bf16.mxu0 0
    %626 = vmatmul.mubr.bf16.gmra.mrb[0].mxu0 %v375
    %v627 = vpop.f32.mrb[0].mxu0
    %v628 = vadd.f32 0.0, %v627
    %v629 = vpop.f32.mrb[0].mxu0
    %v630 = vadd.f32 0.0, %v629
    %v631 = vpop.f32.mrb[0].mxu0
    %v632 = vadd.f32 0.0, %v631
    %v633 = vpop.f32.mrb[0].mxu0
    %v634 = vadd.f32 0.0, %v633
    %635 = vmatprep.mubr.bf16.mxu0 0
    %636 = vmatmul.mubr.bf16.gmra.mrb[0].mxu0 %v376
    %v637 = vpop.f32.mrb[0].mxu0
    %v638 = vadd.f32 0.0, %v637
    %v639 = vpop.f32.mrb[0].mxu0
    %v640 = vadd.f32 0.0, %v639
    %v641 = vpop.f32.mrb[0].mxu0
    %v642 = vadd.f32 0.0, %v641
    %v643 = vpop.f32.mrb[0].mxu0
    %v644 = vadd.f32 0.0, %v643
    %645 = vmatprep.mubr.bf16.mxu0 0
    %646 = vmatmul.mubr.bf16.gmra.mrb[0].mxu0 %v377
    %v647 = vpop.f32.mrb[0].mxu0
    %v648 = vadd.f32 0.0, %v647
    %v649 = vpop.f32.mrb[0].mxu0
    %v650 = vadd.f32 0.0, %v649
    %v651 = vpop.f32.mrb[0].mxu0
    %v652 = vadd.f32 0.0, %v651
    %v653 = vpop.f32.mrb[0].mxu0
    %v654 = vadd.f32 0.0, %v653
    %655 = vmatprep.mubr.bf16.mxu0 0
    %656 = vmatmul.mubr.bf16.gmra.mrb[0].mxu0 %v378
    %v657 = vpop.f32.mrb[0].mxu0
    %v658 = vadd.f32 0.0, %v657
    %v659 = vpop.f32.mrb[0].mxu0
    %v660 = vadd.f32 0.0, %v659
    %v661 = vpop.f32.mrb[0].mxu0
    %v662 = vadd.f32 0.0, %v661
    %v663 = vpop.f32.mrb[0].mxu0
    %v664 = vadd.f32 0.0, %v663
    %665 = vmatprep.mubr.bf16.mxu0 0
    %666 = vmatmul.mubr.bf16.gmra.mrb[0].mxu0 %v379
    %v667 = vpop.f32.mrb[0].mxu0
    %v668 = vadd.f32 0.0, %v667
    %v669 = vpop.f32.mrb[0].mxu0
    %v670 = vadd.f32 0.0, %v669
    %v671 = vpop.f32.mrb[0].mxu0
    %v672 = vadd.f32 0.0, %v671
    %v673 = vpop.f32.mrb[0].mxu0
    %v674 = vadd.f32 0.0, %v673
    %675 = vmatprep.mubr.bf16.mxu0 0
    %676 = vmatmul.mubr.bf16.gmra.mrb[0].mxu0 %v380
    %v677 = vpop.f32.mrb[0].mxu0
    %v678 = vadd.f32 0.0, %v677
    %v679 = vpop.f32.mrb[0].mxu0
    %v680 = vadd.f32 0.0, %v679
    %v681 = vpop.f32.mrb[0].mxu0
    %v682 = vadd.f32 0.0, %v681
    %v683 = vpop.f32.mrb[0].mxu0
    %v684 = vadd.f32 0.0, %v683
    %685 = vmatprep.mubr.bf16.mxu0 0
    %686 = vmatmul.mubr.bf16.gmra.mrb[0].mxu0 %v381
    %v687 = vpop.f32.mrb[0].mxu0
    %v688 = vadd.f32 0.0, %v687
    %v689 = vpop.f32.mrb[0].mxu0
    %v690 = vadd.f32 0.0, %v689
    %v691 = vpop.f32.mrb[0].mxu0
    %v692 = vadd.f32 0.0, %v691
    %v693 = vpop.f32.mrb[0].mxu0
    %v694 = vadd.f32 0.0, %v693
    %695 = vmatprep.mubr.bf16.mxu0 0
    %696 = vmatmul.mubr.bf16.gmra.mrb[0].mxu0 %v382
    %v697 = vpop.f32.mrb[0].mxu0
    %v698 = vadd.f32 0.0, %v697
    %v699 = vpop.f32.mrb[0].mxu0
    %v700 = vadd.f32 0.0, %v699
    %v701 = vpop.f32.mrb[0].mxu0
    %v702 = vadd.f32 0.0, %v701
    %v703 = vpop.f32.mrb[0].mxu0
    %v704 = vadd.f32 0.0, %v703
    %705 = vmatprep.mubr.bf16.mxu0 0
    %706 = vmatmul.mubr.bf16.gmra.mrb[0].mxu0 %v383
    %v707 = vpop.f32.mrb[0].mxu0
    %v708 = vadd.f32 0.0, %v707
    %v709 = vpop.f32.mrb[0].mxu0
    %v710 = vadd.f32 0.0, %v709
    %v711 = vpop.f32.mrb[0].mxu0
    %v712 = vadd.f32 0.0, %v711
    %v713 = vpop.f32.mrb[0].mxu0
    %v714 = vadd.f32 0.0, %v713
    %715 = vmatprep.mubr.bf16.mxu0 0
    %716 = vmatmul.mubr.bf16.gmra.mrb[0].mxu0 %v384
    %v717 = vpop.f32.mrb[0].mxu0
    %v718 = vadd.f32 0.0, %v717
    %v719 = vpop.f32.mrb[0].mxu0
    %v720 = vadd.f32 0.0, %v719
    %v721 = vpop.f32.mrb[0].mxu0
    %v722 = vadd.f32 0.0, %v721
    %v723 = vpop.f32.mrb[0].mxu0
    %v724 = vadd.f32 0.0, %v723
    %725 = vmatprep.mubr.bf16.mxu0 0
    %726 = vmatmul.mubr.bf16.gmra.mrb[0].mxu0 %v385
    %v727 = vpop.f32.mrb[0].mxu0
    %v728 = vadd.f32 0.0, %v727
    %v729 = vpop.f32.mrb[0].mxu0
    %v730 = vadd.f32 0.0, %v729
    %v731 = vpop.f32.mrb[0].mxu0
    %v732 = vadd.f32 0.0, %v731
    %v733 = vpop.f32.mrb[0].mxu0
    %v734 = vadd.f32 0.0, %v733
    %735 = vmatprep.mubr.bf16.mxu0 0
    %736 = vmatmul.mubr.bf16.gmra.mrb[0].mxu0 %v386
    %v737 = vpop.f32.mrb[0].mxu0
    %v738 = vadd.f32 0.0, %v737
    %v739 = vpop.f32.mrb[0].mxu0
    %v740 = vadd.f32 0.0, %v739
    %v741 = vpop.f32.mrb[0].mxu0
    %v742 = vadd.f32 0.0, %v741
    %v743 = vpop.f32.mrb[0].mxu0
    %v744 = vadd.f32 0.0, %v743
    %745 = vmatprep.mubr.bf16.mxu0 0
    %746 = vmatmul.mubr.bf16.gmra.mrb[0].mxu0 %v387
    %v747 = vpop.f32.mrb[0].mxu0
    %v748 = vadd.f32 0.0, %v747
    %v749 = vpop.f32.mrb[0].mxu0
    %v750 = vadd.f32 0.0, %v749
    %v751 = vpop.f32.mrb[0].mxu0
    %v752 = vadd.f32 0.0, %v751
    %v753 = vpop.f32.mrb[0].mxu0
    %v754 = vadd.f32 0.0, %v753
    %755 = vmatprep.mubr.bf16.mxu0 0
    %756 = vmatmul.mubr.bf16.gmra.mrb[0].mxu0 %v388
    %v757 = vpop.f32.mrb[0].mxu0
    %v758 = vadd.f32 0.0, %v757
    %v759 = vpop.f32.mrb[0].mxu0
    %v760 = vadd.f32 0.0, %v759
    %v761 = vpop.f32.mrb[0].mxu0
    %v762 = vadd.f32 0.0, %v761
    %v763 = vpop.f32.mrb[0].mxu0
    %v764 = vadd.f32 0.0, %v763
    %765 = vmatprep.mubr.bf16.mxu0 0
    %766 = vmatmul.mubr.bf16.gmra.mrb[0].mxu0 %v389
    %v767 = vpop.f32.mrb[0].mxu0
    %v768 = vadd.f32 0.0, %v767
    %v769 = vpop.f32.mrb[0].mxu0
    %v770 = vadd.f32 0.0, %v769
    %v771 = vpop.f32.mrb[0].mxu0
    %v772 = vadd.f32 0.0, %v771
    %v773 = vpop.f32.mrb[0].mxu0
    %v774 = vadd.f32 0.0, %v773
    %775 = vmatprep.mubr.bf16.mxu0 0
    %776 = vmatmul.mubr.bf16.gmra.mrb[0].mxu0 %v390
    %v777 = vpop.f32.mrb[0].mxu0
    %v778 = vadd.f32 0.0, %v777
    %v779 = vpop.f32.mrb[0].mxu0
    %v780 = vadd.f32 0.0, %v779
    %v781 = vpop.f32.mrb[0].mxu0
    %v782 = vadd.f32 0.0, %v781
    %v783 = vpop.f32.mrb[0].mxu0
    %v784 = vadd.f32 0.0, %v783
    %785 = vmatprep.mubr.bf16.mxu0 0
    %786 = vmatmul.mubr.bf16.gmra.mrb[0].mxu0 %v391
    %v787 = vpop.f32.mrb[0].mxu0
    %v788 = vadd.f32 0.0, %v787
    %v789 = vpop.f32.mrb[0].mxu0
    %v790 = vadd.f32 0.0, %v789
    %v791 = vpop.f32.mrb[0].mxu0
    %v792 = vadd.f32 0.0, %v791
    %v793 = vpop.f32.mrb[0].mxu0
    %v794 = vadd.f32 0.0, %v793
    %795 = vmatprep.mubr.bf16.mxu0 0
    %796 = vmatmul.mubr.bf16.gmra.mrb[0].mxu0 %v392
    %v797 = vpop.f32.mrb[0].mxu0
    %v798 = vadd.f32 0.0, %v797
    %v799 = vpop.f32.mrb[0].mxu0
    %v800 = vadd.f32 0.0, %v799
    %v801 = vpop.f32.mrb[0].mxu0
    %v802 = vadd.f32 0.0, %v801
    %v803 = vpop.f32.mrb[0].mxu0
    %v804 = vadd.f32 0.0, %v803
    %805 = vmatprep.mubr.bf16.mxu0 0
    %806 = vmatmul.mubr.bf16.gmra.mrb[0].mxu0 %v393
    %v807 = vpop.f32.mrb[0].mxu0
    %v808 = vadd.f32 0.0, %v807
    %v809 = vpop.f32.mrb[0].mxu0
    %v810 = vadd.f32 0.0, %v809
    %v811 = vpop.f32.mrb[0].mxu0
    %v812 = vadd.f32 0.0, %v811
    %v813 = vpop.f32.mrb[0].mxu0
    %v814 = vadd.f32 0.0, %v813
    %815 = vmatprep.mubr.bf16.mxu0 0
    %816 = vmatmul.mubr.bf16.gmra.mrb[0].mxu0 %v394
    %v817 = vpop.f32.mrb[0].mxu0
    %v818 = vadd.f32 0.0, %v817
    %v819 = vpop.f32.mrb[0].mxu0
    %v820 = vadd.f32 0.0, %v819
    %v821 = vpop.f32.mrb[0].mxu0
    %v822 = vadd.f32 0.0, %v821
    %v823 = vpop.f32.mrb[0].mxu0
    %v824 = vadd.f32 0.0, %v823
    %825 = vmatprep.mubr.bf16.mxu0 0
    %826 = vmatmul.mubr.bf16.gmra.mrb[0].mxu0 %v395
    %v827 = vpop.f32.mrb[0].mxu0
    %v828 = vadd.f32 0.0, %v827
    %v829 = vpop.f32.mrb[0].mxu0
    %v830 = vadd.f32 0.0, %v829
    %v831 = vpop.f32.mrb[0].mxu0
    %v832 = vadd.f32 0.0, %v831
    %v833 = vpop.f32.mrb[0].mxu0
    %v834 = vadd.f32 0.0, %v833
    %835 = vmatprep.mubr.bf16.mxu0 0
    %836 = vmatmul.mubr.bf16.gmra.mrb[0].mxu0 %v396
    %v837 = vpop.f32.mrb[0].mxu0
    %v838 = vadd.f32 0.0, %v837
    %v839 = vpop.f32.mrb[0].mxu0
    %v840 = vadd.f32 0.0, %v839
    %v841 = vpop.f32.mrb[0].mxu0
    %v842 = vadd.f32 0.0, %v841
    %v843 = vpop.f32.mrb[0].mxu0
    %v844 = vadd.f32 0.0, %v843
    %845 = vdwg.mxu0
    %v846 = vadd.f32 %v173, %v528
    %v847 = vadd.f32 %v174, %v530
    %v848 = vadd.f32 %v175, %v532
    %v849 = vadd.f32 %v176, %v534
    %v850 = vadd.f32 %v177, %v538
    %v851 = vadd.f32 %v178, %v540
    %v852 = vadd.f32 %v179, %v542
    %v853 = vadd.f32 %v180, %v544
    %v854 = vadd.f32 %v181, %v548
    %v855 = vadd.f32 %v182, %v550
    %v856 = vadd.f32 %v183, %v552
    %v857 = vadd.f32 %v184, %v554
    %v858 = vadd.f32 %v185, %v558
    %v859 = vadd.f32 %v186, %v560
    %v860 = vadd.f32 %v187, %v562
    %v861 = vadd.f32 %v188, %v564
    %v862 = vadd.f32 %v189, %v568
    %v863 = vadd.f32 %v190, %v570
    %v864 = vadd.f32 %v191, %v572
    %v865 = vadd.f32 %v192, %v574
    %v866 = vadd.f32 %v193, %v578
    %v867 = vadd.f32 %v194, %v580
    %v868 = vadd.f32 %v195, %v582
    %v869 = vadd.f32 %v196, %v584
    %v870 = vadd.f32 %v197, %v588
    %v871 = vadd.f32 %v198, %v590
    %v872 = vadd.f32 %v199, %v592
    %v873 = vadd.f32 %v200, %v594
    %v874 = vadd.f32 %v201, %v598
    %v875 = vadd.f32 %v202, %v600
    %v876 = vadd.f32 %v203, %v602
    %v877 = vadd.f32 %v204, %v604
    %v878 = vadd.f32 %v205, %v608
    %v879 = vadd.f32 %v206, %v610
    %v880 = vadd.f32 %v207, %v612
    %v881 = vadd.f32 %v208, %v614
    %v882 = vadd.f32 %v209, %v618
    %v883 = vadd.f32 %v210, %v620
    %v884 = vadd.f32 %v211, %v622
    %v885 = vadd.f32 %v212, %v624
    %v886 = vadd.f32 %v213, %v628
    %v887 = vadd.f32 %v214, %v630
    %v888 = vadd.f32 %v215, %v632
    %v889 = vadd.f32 %v216, %v634
    %v890 = vadd.f32 %v217, %v638
    %v891 = vadd.f32 %v218, %v640
    %v892 = vadd.f32 %v219, %v642
    %v893 = vadd.f32 %v220, %v644
    %v894 = vadd.f32 %v221, %v648
    %v895 = vadd.f32 %v222, %v650
    %v896 = vadd.f32 %v223, %v652
    %v897 = vadd.f32 %v224, %v654
    %v898 = vadd.f32 %v225, %v658
    %v899 = vadd.f32 %v226, %v660
    %v900 = vadd.f32 %v227, %v662
    %v901 = vadd.f32 %v228, %v664
    %v902 = vadd.f32 %v229, %v668
    %v903 = vadd.f32 %v230, %v670
    %v904 = vadd.f32 %v231, %v672
    %v905 = vadd.f32 %v232, %v674
    %v906 = vadd.f32 %v233, %v678
    %v907 = vadd.f32 %v234, %v680
    %v908 = vadd.f32 %v235, %v682
    %v909 = vadd.f32 %v236, %v684
    %v910 = vadd.f32 %v237, %v688
    %v911 = vadd.f32 %v238, %v690
    %v912 = vadd.f32 %v239, %v692
    %v913 = vadd.f32 %v240, %v694
    %v914 = vadd.f32 %v241, %v698
    %v915 = vadd.f32 %v242, %v700
    %v916 = vadd.f32 %v243, %v702
    %v917 = vadd.f32 %v244, %v704
    %v918 = vadd.f32 %v245, %v708
    %v919 = vadd.f32 %v246, %v710
    %v920 = vadd.f32 %v247, %v712
    %v921 = vadd.f32 %v248, %v714
    %v922 = vadd.f32 %v249, %v718
    %v923 = vadd.f32 %v250, %v720
    %v924 = vadd.f32 %v251, %v722
    %v925 = vadd.f32 %v252, %v724
    %v926 = vadd.f32 %v253, %v728
    %v927 = vadd.f32 %v254, %v730
    %v928 = vadd.f32 %v255, %v732
    %v929 = vadd.f32 %v256, %v734
    %v930 = vadd.f32 %v257, %v738
    %v931 = vadd.f32 %v258, %v740
    %v932 = vadd.f32 %v259, %v742
    %v933 = vadd.f32 %v260, %v744
    %v934 = vadd.f32 %v261, %v748
    %v935 = vadd.f32 %v262, %v750
    %v936 = vadd.f32 %v263, %v752
    %v937 = vadd.f32 %v264, %v754
    %v938 = vadd.f32 %v265, %v758
    %v939 = vadd.f32 %v266, %v760
    %v940 = vadd.f32 %v267, %v762
    %v941 = vadd.f32 %v268, %v764
    %v942 = vadd.f32 %v269, %v768
    %v943 = vadd.f32 %v270, %v770
    %v944 = vadd.f32 %v271, %v772
    %v945 = vadd.f32 %v272, %v774
    %v946 = vadd.f32 %v273, %v778
    %v947 = vadd.f32 %v274, %v780
    %v948 = vadd.f32 %v275, %v782
    %v949 = vadd.f32 %v276, %v784
    %v950 = vadd.f32 %v277, %v788
    %v951 = vadd.f32 %v278, %v790
    %v952 = vadd.f32 %v279, %v792
    %v953 = vadd.f32 %v280, %v794
    %v954 = vadd.f32 %v281, %v798
    %v955 = vadd.f32 %v282, %v800
    %v956 = vadd.f32 %v283, %v802
    %v957 = vadd.f32 %v284, %v804
    %v958 = vadd.f32 %v285, %v808
    %v959 = vadd.f32 %v286, %v810
    %v960 = vadd.f32 %v287, %v812
    %v961 = vadd.f32 %v288, %v814
    %v962 = vadd.f32 %v289, %v818
    %v963 = vadd.f32 %v290, %v820
    %v964 = vadd.f32 %v291, %v822
    %v965 = vadd.f32 %v292, %v824
    %v966 = vadd.f32 %v293, %v828
    %v967 = vadd.f32 %v294, %v830
    %v968 = vadd.f32 %v295, %v832
    %v969 = vadd.f32 %v296, %v834
    %v970 = vadd.f32 %v297, %v838
    %v971 = vadd.f32 %v298, %v840
    %v972 = vadd.f32 %v299, %v842
    %v973 = vadd.f32 %v300, %v844
    %974 = vst [vmem:[#allocation2] sm:$0xff] %v846
    %975 = vst [vmem:[#allocation2 + $0x8] sm:$0xff] %v847
    %976 = vst [vmem:[#allocation2 + $0x10] sm:$0xff] %v848
    %977 = vst [vmem:[#allocation2 + $0x18] sm:$0xff] %v849
    %978 = vst [vmem:[#allocation2 + $0x20] sm:$0xff] %v850
    %979 = vst [vmem:[#allocation2 + $0x28] sm:$0xff] %v851
    %980 = vst [vmem:[#allocation2 + $0x30] sm:$0xff] %v852
    %981 = vst [vmem:[#allocation2 + $0x38] sm:$0xff] %v853
    %982 = vst [vmem:[#allocation2 + $0x40] sm:$0xff] %v854
    %983 = vst [vmem:[#allocation2 + $0x48] sm:$0xff] %v855
    %984 = vst [vmem:[#allocation2 + $0x50] sm:$0xff] %v856
    %985 = vst [vmem:[#allocation2 + $0x58] sm:$0xff] %v857
    %986 = vst [vmem:[#allocation2 + $0x60] sm:$0xff] %v858
    %987 = vst [vmem:[#allocation2 + $0x68] sm:$0xff] %v859
    %988 = vst [vmem:[#allocation2 + $0x70] sm:$0xff] %v860
    %989 = vst [vmem:[#allocation2 + $0x78] sm:$0xff] %v861
    %990 = vst [vmem:[#allocation2 + $0x80] sm:$0xff] %v862
    %991 = vst [vmem:[#allocation2 + $0x88] sm:$0xff] %v863
    %992 = vst [vmem:[#allocation2 + $0x90] sm:$0xff] %v864
    %993 = vst [vmem:[#allocation2 + $0x98] sm:$0xff] %v865
    %994 = vst [vmem:[#allocation2 + $0xa0] sm:$0xff] %v866
    %995 = vst [vmem:[#allocation2 + $0xa8] sm:$0xff] %v867
    %996 = vst [vmem:[#allocation2 + $0xb0] sm:$0xff] %v868
    %997 = vst [vmem:[#allocation2 + $0xb8] sm:$0xff] %v869
    %998 = vst [vmem:[#allocation2 + $0xc0] sm:$0xff] %v870
    %999 = vst [vmem:[#allocation2 + $0xc8] sm:$0xff] %v871
    %1000 = vst [vmem:[#allocation2 + $0xd0] sm:$0xff] %v872
    %1001 = vst [vmem:[#allocation2 + $0xd8] sm:$0xff] %v873
    %1002 = vst [vmem:[#allocation2 + $0xe0] sm:$0xff] %v874
    %1003 = vst [vmem:[#allocation2 + $0xe8] sm:$0xff] %v875
    %1004 = vst [vmem:[#allocation2 + $0xf0] sm:$0xff] %v876
    %1005 = vst [vmem:[#allocation2 + $0xf8] sm:$0xff] %v877
    %1006 = vst [vmem:[#allocation2 + $0x100] sm:$0xff] %v878
    %1007 = vst [vmem:[#allocation2 + $0x108] sm:$0xff] %v879
    %1008 = vst [vmem:[#allocation2 + $0x110] sm:$0xff] %v880
    %1009 = vst [vmem:[#allocation2 + $0x118] sm:$0xff] %v881
    %1010 = vst [vmem:[#allocation2 + $0x120] sm:$0xff] %v882
    %1011 = vst [vmem:[#allocation2 + $0x128] sm:$0xff] %v883
    %1012 = vst [vmem:[#allocation2 + $0x130] sm:$0xff] %v884
    %1013 = vst [vmem:[#allocation2 + $0x138] sm:$0xff] %v885
    %1014 = vst [vmem:[#allocation2 + $0x140] sm:$0xff] %v886
    %1015 = vst [vmem:[#allocation2 + $0x148] sm:$0xff] %v887
    %1016 = vst [vmem:[#allocation2 + $0x150] sm:$0xff] %v888
    %1017 = vst [vmem:[#allocation2 + $0x158] sm:$0xff] %v889
    %1018 = vst [vmem:[#allocation2 + $0x160] sm:$0xff] %v890
    %1019 = vst [vmem:[#allocation2 + $0x168] sm:$0xff] %v891
    %1020 = vst [vmem:[#allocation2 + $0x170] sm:$0xff] %v892
    %1021 = vst [vmem:[#allocation2 + $0x178] sm:$0xff] %v893
    %1022 = vst [vmem:[#allocation2 + $0x180] sm:$0xff] %v894
    %1023 = vst [vmem:[#allocation2 + $0x188] sm:$0xff] %v895
    %1024 = vst [vmem:[#allocation2 + $0x190] sm:$0xff] %v896
    %1025 = vst [vmem:[#allocation2 + $0x198] sm:$0xff] %v897
    %1026 = vst [vmem:[#allocation2 + $0x1a0] sm:$0xff] %v898
    %1027 = vst [vmem:[#allocation2 + $0x1a8] sm:$0xff] %v899
    %1028 = vst [vmem:[#allocation2 + $0x1b0] sm:$0xff] %v900
    %1029 = vst [vmem:[#allocation2 + $0x1b8] sm:$0xff] %v901
    %1030 = vst [vmem:[#allocation2 + $0x1c0] sm:$0xff] %v902
    %1031 = vst [vmem:[#allocation2 + $0x1c8] sm:$0xff] %v903
    %1032 = vst [vmem:[#allocation2 + $0x1d0] sm:$0xff] %v904
    %1033 = vst [vmem:[#allocation2 + $0x1d8] sm:$0xff] %v905
    %1034 = vst [vmem:[#allocation2 + $0x1e0] sm:$0xff] %v906
    %1035 = vst [vmem:[#allocation2 + $0x1e8] sm:$0xff] %v907
    %1036 = vst [vmem:[#allocation2 + $0x1f0] sm:$0xff] %v908
    %1037 = vst [vmem:[#allocation2 + $0x1f8] sm:$0xff] %v909
    %1038 = vst [vmem:[#allocation2 + $0x200] sm:$0xff] %v910
    %1039 = vst [vmem:[#allocation2 + $0x208] sm:$0xff] %v911
    %1040 = vst [vmem:[#allocation2 + $0x210] sm:$0xff] %v912
    %1041 = vst [vmem:[#allocation2 + $0x218] sm:$0xff] %v913
    %1042 = vst [vmem:[#allocation2 + $0x220] sm:$0xff] %v914
    %1043 = vst [vmem:[#allocation2 + $0x228] sm:$0xff] %v915
    %1044 = vst [vmem:[#allocation2 + $0x230] sm:$0xff] %v916
    %1045 = vst [vmem:[#allocation2 + $0x238] sm:$0xff] %v917
    %1046 = vst [vmem:[#allocation2 + $0x240] sm:$0xff] %v918
    %1047 = vst [vmem:[#allocation2 + $0x248] sm:$0xff] %v919
    %1048 = vst [vmem:[#allocation2 + $0x250] sm:$0xff] %v920
    %1049 = vst [vmem:[#allocation2 + $0x258] sm:$0xff] %v921
    %1050 = vst [vmem:[#allocation2 + $0x260] sm:$0xff] %v922
    %1051 = vst [vmem:[#allocation2 + $0x268] sm:$0xff] %v923
    %1052 = vst [vmem:[#allocation2 + $0x270] sm:$0xff] %v924
    %1053 = vst [vmem:[#allocation2 + $0x278] sm:$0xff] %v925
    %1054 = vst [vmem:[#allocation2 + $0x280] sm:$0xff] %v926
    %1055 = vst [vmem:[#allocation2 + $0x288] sm:$0xff] %v927
    %1056 = vst [vmem:[#allocation2 + $0x290] sm:$0xff] %v928
    %1057 = vst [vmem:[#allocation2 + $0x298] sm:$0xff] %v929
    %1058 = vst [vmem:[#allocation2 + $0x2a0] sm:$0xff] %v930
    %1059 = vst [vmem:[#allocation2 + $0x2a8] sm:$0xff] %v931
    %1060 = vst [vmem:[#allocation2 + $0x2b0] sm:$0xff] %v932
    %1061 = vst [vmem:[#allocation2 + $0x2b8] sm:$0xff] %v933
    %1062 = vst [vmem:[#allocation2 + $0x2c0] sm:$0xff] %v934
    %1063 = vst [vmem:[#allocation2 + $0x2c8] sm:$0xff] %v935
    %1064 = vst [vmem:[#allocation2 + $0x2d0] sm:$0xff] %v936
    %1065 = vst [vmem:[#allocation2 + $0x2d8] sm:$0xff] %v937
    %1066 = vst [vmem:[#allocation2 + $0x2e0] sm:$0xff] %v938
    %1067 = vst [vmem:[#allocation2 + $0x2e8] sm:$0xff] %v939
    %1068 = vst [vmem:[#allocation2 + $0x2f0] sm:$0xff] %v940
    %1069 = vst [vmem:[#allocation2 + $0x2f8] sm:$0xff] %v941
    %1070 = vst [vmem:[#allocation2 + $0x300] sm:$0xff] %v942
    %1071 = vst [vmem:[#allocation2 + $0x308] sm:$0xff] %v943
    %1072 = vst [vmem:[#allocation2 + $0x310] sm:$0xff] %v944
    %1073 = vst [vmem:[#allocation2 + $0x318] sm:$0xff] %v945
    %1074 = vst [vmem:[#allocation2 + $0x320] sm:$0xff] %v946
    %1075 = vst [vmem:[#allocation2 + $0x328] sm:$0xff] %v947
    %1076 = vst [vmem:[#allocation2 + $0x330] sm:$0xff] %v948
    %1077 = vst [vmem:[#allocation2 + $0x338] sm:$0xff] %v949
    %1078 = vst [vmem:[#allocation2 + $0x340] sm:$0xff] %v950
    %1079 = vst [vmem:[#allocation2 + $0x348] sm:$0xff] %v951
    %1080 = vst [vmem:[#allocation2 + $0x350] sm:$0xff] %v952
    %1081 = vst [vmem:[#allocation2 + $0x358] sm:$0xff] %v953
    %1082 = vst [vmem:[#allocation2 + $0x360] sm:$0xff] %v954
    %1083 = vst [vmem:[#allocation2 + $0x368] sm:$0xff] %v955
    %1084 = vst [vmem:[#allocation2 + $0x370] sm:$0xff] %v956
    %1085 = vst [vmem:[#allocation2 + $0x378] sm:$0xff] %v957
    %1086 = vst [vmem:[#allocation2 + $0x380] sm:$0xff] %v958
    %1087 = vst [vmem:[#allocation2 + $0x388] sm:$0xff] %v959
    %1088 = vst [vmem:[#allocation2 + $0x390] sm:$0xff] %v960
    %1089 = vst [vmem:[#allocation2 + $0x398] sm:$0xff] %v961
    %1090 = vst [vmem:[#allocation2 + $0x3a0] sm:$0xff] %v962
    %1091 = vst [vmem:[#allocation2 + $0x3a8] sm:$0xff] %v963
    %1092 = vst [vmem:[#allocation2 + $0x3b0] sm:$0xff] %v964
    %1093 = vst [vmem:[#allocation2 + $0x3b8] sm:$0xff] %v965
    %1094 = vst [vmem:[#allocation2 + $0x3c0] sm:$0xff] %v966
    %1095 = vst [vmem:[#allocation2 + $0x3c8] sm:$0xff] %v967
    %1096 = vst [vmem:[#allocation2 + $0x3d0] sm:$0xff] %v968
    %1097 = vst [vmem:[#allocation2 + $0x3d8] sm:$0xff] %v969
    %1098 = vst [vmem:[#allocation2 + $0x3e0] sm:$0xff] %v970
    %1099 = vst [vmem:[#allocation2 + $0x3e8] sm:$0xff] %v971
    %1100 = vst [vmem:[#allocation2 + $0x3f0] sm:$0xff] %v972
    %1101 = vst [vmem:[#allocation2 + $0x3f8] sm:$0xff] %v973
    // Predicated region
    $region22: #{tpu_custom_call.1} parent=1 // pred_check
      %p1102 = pneg %p41
    $region23: #{tpu_custom_call.1} parent=1 // pred_check_branch
      %1104 = sbr.rel (%p1102) target = $region25
    $region24: #{tpu_custom_call.1} parent=1 // pred_region
      %v1105 = vld [vmem:[#allocation2] sm:$0xff]
      %v1106 = vld [vmem:[#allocation2 + $0x8] sm:$0xff]
      %v1107 = vld [vmem:[#allocation2 + $0x10] sm:$0xff]
      %v1108 = vld [vmem:[#allocation2 + $0x18] sm:$0xff]
      %v1109 = vld [vmem:[#allocation2 + $0x20] sm:$0xff]
      %v1110 = vld [vmem:[#allocation2 + $0x28] sm:$0xff]
      %v1111 = vld [vmem:[#allocation2 + $0x30] sm:$0xff]
      %v1112 = vld [vmem:[#allocation2 + $0x38] sm:$0xff]
      %v1113 = vld [vmem:[#allocation2 + $0x40] sm:$0xff]
      %v1114 = vld [vmem:[#allocation2 + $0x48] sm:$0xff]
      %v1115 = vld [vmem:[#allocation2 + $0x50] sm:$0xff]
      %v1116 = vld [vmem:[#allocation2 + $0x58] sm:$0xff]
      %v1117 = vld [vmem:[#allocation2 + $0x60] sm:$0xff]
      %v1118 = vld [vmem:[#allocation2 + $0x68] sm:$0xff]
      %v1119 = vld [vmem:[#allocation2 + $0x70] sm:$0xff]
      %v1120 = vld [vmem:[#allocation2 + $0x78] sm:$0xff]
      %v1121 = vld [vmem:[#allocation2 + $0x80] sm:$0xff]
      %v1122 = vld [vmem:[#allocation2 + $0x88] sm:$0xff]
      %v1123 = vld [vmem:[#allocation2 + $0x90] sm:$0xff]
      %v1124 = vld [vmem:[#allocation2 + $0x98] sm:$0xff]
      %v1125 = vld [vmem:[#allocation2 + $0xa0] sm:$0xff]
      %v1126 = vld [vmem:[#allocation2 + $0xa8] sm:$0xff]
      %v1127 = vld [vmem:[#allocation2 + $0xb0] sm:$0xff]
      %v1128 = vld [vmem:[#allocation2 + $0xb8] sm:$0xff]
      %v1129 = vld [vmem:[#allocation2 + $0xc0] sm:$0xff]
      %v1130 = vld [vmem:[#allocation2 + $0xc8] sm:$0xff]
      %v1131 = vld [vmem:[#allocation2 + $0xd0] sm:$0xff]
      %v1132 = vld [vmem:[#allocation2 + $0xd8] sm:$0xff]
      %v1133 = vld [vmem:[#allocation2 + $0xe0] sm:$0xff]
      %v1134 = vld [vmem:[#allocation2 + $0xe8] sm:$0xff]
      %v1135 = vld [vmem:[#allocation2 + $0xf0] sm:$0xff]
      %v1136 = vld [vmem:[#allocation2 + $0xf8] sm:$0xff]
      %v1137 = vld [vmem:[#allocation2 + $0x100] sm:$0xff]
      %v1138 = vld [vmem:[#allocation2 + $0x108] sm:$0xff]
      %v1139 = vld [vmem:[#allocation2 + $0x110] sm:$0xff]
      %v1140 = vld [vmem:[#allocation2 + $0x118] sm:$0xff]
      %v1141 = vld [vmem:[#allocation2 + $0x120] sm:$0xff]
      %v1142 = vld [vmem:[#allocation2 + $0x128] sm:$0xff]
      %v1143 = vld [vmem:[#allocation2 + $0x130] sm:$0xff]
      %v1144 = vld [vmem:[#allocation2 + $0x138] sm:$0xff]
      %v1145 = vld [vmem:[#allocation2 + $0x140] sm:$0xff]
      %v1146 = vld [vmem:[#allocation2 + $0x148] sm:$0xff]
      %v1147 = vld [vmem:[#allocation2 + $0x150] sm:$0xff]
      %v1148 = vld [vmem:[#allocation2 + $0x158] sm:$0xff]
      %v1149 = vld [vmem:[#allocation2 + $0x160] sm:$0xff]
      %v1150 = vld [vmem:[#allocation2 + $0x168] sm:$0xff]
      %v1151 = vld [vmem:[#allocation2 + $0x170] sm:$0xff]
      %v1152 = vld [vmem:[#allocation2 + $0x178] sm:$0xff]
      %v1153 = vld [vmem:[#allocation2 + $0x180] sm:$0xff]
      %v1154 = vld [vmem:[#allocation2 + $0x188] sm:$0xff]
      %v1155 = vld [vmem:[#allocation2 + $0x190] sm:$0xff]
      %v1156 = vld [vmem:[#allocation2 + $0x198] sm:$0xff]
      %v1157 = vld [vmem:[#allocation2 + $0x1a0] sm:$0xff]
      %v1158 = vld [vmem:[#allocation2 + $0x1a8] sm:$0xff]
      %v1159 = vld [vmem:[#allocation2 + $0x1b0] sm:$0xff]
      %v1160 = vld [vmem:[#allocation2 + $0x1b8] sm:$0xff]
      %v1161 = vld [vmem:[#allocation2 + $0x1c0] sm:$0xff]
      %v1162 = vld [vmem:[#allocation2 + $0x1c8] sm:$0xff]
      %v1163 = vld [vmem:[#allocation2 + $0x1d0] sm:$0xff]
      %v1164 = vld [vmem:[#allocation2 + $0x1d8] sm:$0xff]
      %v1165 = vld [vmem:[#allocation2 + $0x1e0] sm:$0xff]
      %v1166 = vld [vmem:[#allocation2 + $0x1e8] sm:$0xff]
      %v1167 = vld [vmem:[#allocation2 + $0x1f0] sm:$0xff]
      %v1168 = vld [vmem:[#allocation2 + $0x1f8] sm:$0xff]
      %v1169 = vld [vmem:[#allocation2 + $0x200] sm:$0xff]
      %v1170 = vld [vmem:[#allocation2 + $0x208] sm:$0xff]
      %v1171 = vld [vmem:[#allocation2 + $0x210] sm:$0xff]
      %v1172 = vld [vmem:[#allocation2 + $0x218] sm:$0xff]
      %v1173 = vld [vmem:[#allocation2 + $0x220] sm:$0xff]
      %v1174 = vld [vmem:[#allocation2 + $0x228] sm:$0xff]
      %v1175 = vld [vmem:[#allocation2 + $0x230] sm:$0xff]
      %v1176 = vld [vmem:[#allocation2 + $0x238] sm:$0xff]
      %v1177 = vld [vmem:[#allocation2 + $0x240] sm:$0xff]
      %v1178 = vld [vmem:[#allocation2 + $0x248] sm:$0xff]
      %v1179 = vld [vmem:[#allocation2 + $0x250] sm:$0xff]
      %v1180 = vld [vmem:[#allocation2 + $0x258] sm:$0xff]
      %v1181 = vld [vmem:[#allocation2 + $0x260] sm:$0xff]
      %v1182 = vld [vmem:[#allocation2 + $0x268] sm:$0xff]
      %v1183 = vld [vmem:[#allocation2 + $0x270] sm:$0xff]
      %v1184 = vld [vmem:[#allocation2 + $0x278] sm:$0xff]
      %v1185 = vld [vmem:[#allocation2 + $0x280] sm:$0xff]
      %v1186 = vld [vmem:[#allocation2 + $0x288] sm:$0xff]
      %v1187 = vld [vmem:[#allocation2 + $0x290] sm:$0xff]
      %v1188 = vld [vmem:[#allocation2 + $0x298] sm:$0xff]
      %v1189 = vld [vmem:[#allocation2 + $0x2a0] sm:$0xff]
      %v1190 = vld [vmem:[#allocation2 + $0x2a8] sm:$0xff]
      %v1191 = vld [vmem:[#allocation2 + $0x2b0] sm:$0xff]
      %v1192 = vld [vmem:[#allocation2 + $0x2b8] sm:$0xff]
      %v1193 = vld [vmem:[#allocation2 + $0x2c0] sm:$0xff]
      %v1194 = vld [vmem:[#allocation2 + $0x2c8] sm:$0xff]
      %v1195 = vld [vmem:[#allocation2 + $0x2d0] sm:$0xff]
      %v1196 = vld [vmem:[#allocation2 + $0x2d8] sm:$0xff]
      %v1197 = vld [vmem:[#allocation2 + $0x2e0] sm:$0xff]
      %v1198 = vld [vmem:[#allocation2 + $0x2e8] sm:$0xff]
      %v1199 = vld [vmem:[#allocation2 + $0x2f0] sm:$0xff]
      %v1200 = vld [vmem:[#allocation2 + $0x2f8] sm:$0xff]
      %v1201 = vld [vmem:[#allocation2 + $0x300] sm:$0xff]
      %v1202 = vld [vmem:[#allocation2 + $0x308] sm:$0xff]
      %v1203 = vld [vmem:[#allocation2 + $0x310] sm:$0xff]
      %v1204 = vld [vmem:[#allocation2 + $0x318] sm:$0xff]
      %v1205 = vld [vmem:[#allocation2 + $0x320] sm:$0xff]
      %v1206 = vld [vmem:[#allocation2 + $0x328] sm:$0xff]
      %v1207 = vld [vmem:[#allocation2 + $0x330] sm:$0xff]
      %v1208 = vld [vmem:[#allocation2 + $0x338] sm:$0xff]
      %v1209 = vld [vmem:[#allocation2 + $0x340] sm:$0xff]
      %v1210 = vld [vmem:[#allocation2 + $0x348] sm:$0xff]
      %v1211 = vld [vmem:[#allocation2 + $0x350] sm:$0xff]
      %v1212 = vld [vmem:[#allocation2 + $0x358] sm:$0xff]
      %v1213 = vld [vmem:[#allocation2 + $0x360] sm:$0xff]
      %v1214 = vld [vmem:[#allocation2 + $0x368] sm:$0xff]
      %v1215 = vld [vmem:[#allocation2 + $0x370] sm:$0xff]
      %v1216 = vld [vmem:[#allocation2 + $0x378] sm:$0xff]
      %v1217 = vld [vmem:[#allocation2 + $0x380] sm:$0xff]
      %v1218 = vld [vmem:[#allocation2 + $0x388] sm:$0xff]
      %v1219 = vld [vmem:[#allocation2 + $0x390] sm:$0xff]
      %v1220 = vld [vmem:[#allocation2 + $0x398] sm:$0xff]
      %v1221 = vld [vmem:[#allocation2 + $0x3a0] sm:$0xff]
      %v1222 = vld [vmem:[#allocation2 + $0x3a8] sm:$0xff]
      %v1223 = vld [vmem:[#allocation2 + $0x3b0] sm:$0xff]
      %v1224 = vld [vmem:[#allocation2 + $0x3b8] sm:$0xff]
      %v1225 = vld [vmem:[#allocation2 + $0x3c0] sm:$0xff]
      %v1226 = vld [vmem:[#allocation2 + $0x3c8] sm:$0xff]
      %v1227 = vld [vmem:[#allocation2 + $0x3d0] sm:$0xff]
      %v1228 = vld [vmem:[#allocation2 + $0x3d8] sm:$0xff]
      %v1229 = vld [vmem:[#allocation2 + $0x3e0] sm:$0xff]
      %v1230 = vld [vmem:[#allocation2 + $0x3e8] sm:$0xff]
      %v1231 = vld [vmem:[#allocation2 + $0x3f0] sm:$0xff]
      %v1232 = vld [vmem:[#allocation2 + $0x3f8] sm:$0xff]
      %v1233 = vpack.c.bf16 %v1107, %v1105
      %v1234 = vpack.c.bf16 %v1108, %v1106
      %v1235 = vpack.c.bf16 %v1111, %v1109
      %v1236 = vpack.c.bf16 %v1112, %v1110
      %v1237 = vpack.c.bf16 %v1115, %v1113
      %v1238 = vpack.c.bf16 %v1116, %v1114
      %v1239 = vpack.c.bf16 %v1119, %v1117
      %v1240 = vpack.c.bf16 %v1120, %v1118
      %v1241 = vpack.c.bf16 %v1123, %v1121
      %v1242 = vpack.c.bf16 %v1124, %v1122
      %v1243 = vpack.c.bf16 %v1127, %v1125
      %v1244 = vpack.c.bf16 %v1128, %v1126
      %v1245 = vpack.c.bf16 %v1131, %v1129
      %v1246 = vpack.c.bf16 %v1132, %v1130
      %v1247 = vpack.c.bf16 %v1135, %v1133
      %v1248 = vpack.c.bf16 %v1136, %v1134
      %v1249 = vpack.c.bf16 %v1139, %v1137
      %v1250 = vpack.c.bf16 %v1140, %v1138
      %v1251 = vpack.c.bf16 %v1143, %v1141
      %v1252 = vpack.c.bf16 %v1144, %v1142
      %v1253 = vpack.c.bf16 %v1147, %v1145
      %v1254 = vpack.c.bf16 %v1148, %v1146
      %v1255 = vpack.c.bf16 %v1151, %v1149
      %v1256 = vpack.c.bf16 %v1152, %v1150
      %v1257 = vpack.c.bf16 %v1155, %v1153
      %v1258 = vpack.c.bf16 %v1156, %v1154
      %v1259 = vpack.c.bf16 %v1159, %v1157
      %v1260 = vpack.c.bf16 %v1160, %v1158
      %v1261 = vpack.c.bf16 %v1163, %v1161
      %v1262 = vpack.c.bf16 %v1164, %v1162
      %v1263 = vpack.c.bf16 %v1167, %v1165
      %v1264 = vpack.c.bf16 %v1168, %v1166
      %v1265 = vpack.c.bf16 %v1171, %v1169
      %v1266 = vpack.c.bf16 %v1172, %v1170
      %v1267 = vpack.c.bf16 %v1175, %v1173
      %v1268 = vpack.c.bf16 %v1176, %v1174
      %v1269 = vpack.c.bf16 %v1179, %v1177
      %v1270 = vpack.c.bf16 %v1180, %v1178
      %v1271 = vpack.c.bf16 %v1183, %v1181
      %v1272 = vpack.c.bf16 %v1184, %v1182
      %v1273 = vpack.c.bf16 %v1187, %v1185
      %v1274 = vpack.c.bf16 %v1188, %v1186
      %v1275 = vpack.c.bf16 %v1191, %v1189
      %v1276 = vpack.c.bf16 %v1192, %v1190
      %v1277 = vpack.c.bf16 %v1195, %v1193
      %v1278 = vpack.c.bf16 %v1196, %v1194
      %v1279 = vpack.c.bf16 %v1199, %v1197
      %v1280 = vpack.c.bf16 %v1200, %v1198
      %v1281 = vpack.c.bf16 %v1203, %v1201
      %v1282 = vpack.c.bf16 %v1204, %v1202
      %v1283 = vpack.c.bf16 %v1207, %v1205
      %v1284 = vpack.c.bf16 %v1208, %v1206
      %v1285 = vpack.c.bf16 %v1211, %v1209
      %v1286 = vpack.c.bf16 %v1212, %v1210
      %v1287 = vpack.c.bf16 %v1215, %v1213
      %v1288 = vpack.c.bf16 %v1216, %v1214
      %v1289 = vpack.c.bf16 %v1219, %v1217
      %v1290 = vpack.c.bf16 %v1220, %v1218
      %v1291 = vpack.c.bf16 %v1223, %v1221
      %v1292 = vpack.c.bf16 %v1224, %v1222
      %v1293 = vpack.c.bf16 %v1227, %v1225
      %v1294 = vpack.c.bf16 %v1228, %v1226
      %v1295 = vpack.c.bf16 %v1231, %v1229
      %v1296 = vpack.c.bf16 %v1232, %v1230
      %v1361 = vunpack.c.l.b16 %v1233
      %v1362 = vunpack.c.l.b16 %v1234
      %v1363 = vunpack.c.h.b16 %v1233
      %v1364 = vunpack.c.h.b16 %v1234
      %v1365 = vunpack.c.l.b16 %v1235
      %v1366 = vunpack.c.l.b16 %v1236
      %v1367 = vunpack.c.h.b16 %v1235
      %v1368 = vunpack.c.h.b16 %v1236
      %v1369 = vunpack.c.l.b16 %v1237
      %v1370 = vunpack.c.l.b16 %v1238
      %v1371 = vunpack.c.h.b16 %v1237
      %v1372 = vunpack.c.h.b16 %v1238
      %v1373 = vunpack.c.l.b16 %v1239
      %v1374 = vunpack.c.l.b16 %v1240
      %v1375 = vunpack.c.h.b16 %v1239
      %v1376 = vunpack.c.h.b16 %v1240
      %v1377 = vunpack.c.l.b16 %v1241
      %v1378 = vunpack.c.l.b16 %v1242
      %v1379 = vunpack.c.h.b16 %v1241
      %v1380 = vunpack.c.h.b16 %v1242
      %v1381 = vunpack.c.l.b16 %v1243
      %v1382 = vunpack.c.l.b16 %v1244
      %v1383 = vunpack.c.h.b16 %v1243
      %v1384 = vunpack.c.h.b16 %v1244
      %v1385 = vunpack.c.l.b16 %v1245
      %v1386 = vunpack.c.l.b16 %v1246
      %v1387 = vunpack.c.h.b16 %v1245
      %v1388 = vunpack.c.h.b16 %v1246
      %v1389 = vunpack.c.l.b16 %v1247
      %v1390 = vunpack.c.l.b16 %v1248
      %v1391 = vunpack.c.h.b16 %v1247
      %v1392 = vunpack.c.h.b16 %v1248
      %v1393 = vunpack.c.l.b16 %v1249
      %v1394 = vunpack.c.l.b16 %v1250
      %v1395 = vunpack.c.h.b16 %v1249
      %v1396 = vunpack.c.h.b16 %v1250
      %v1397 = vunpack.c.l.b16 %v1251
      %v1398 = vunpack.c.l.b16 %v1252
      %v1399 = vunpack.c.h.b16 %v1251
      %v1400 = vunpack.c.h.b16 %v1252
      %v1401 = vunpack.c.l.b16 %v1253
      %v1402 = vunpack.c.l.b16 %v1254
      %v1403 = vunpack.c.h.b16 %v1253
      %v1404 = vunpack.c.h.b16 %v1254
      %v1405 = vunpack.c.l.b16 %v1255
      %v1406 = vunpack.c.l.b16 %v1256
      %v1407 = vunpack.c.h.b16 %v1255
      %v1408 = vunpack.c.h.b16 %v1256
      %v1409 = vunpack.c.l.b16 %v1257
      %v1410 = vunpack.c.l.b16 %v1258
      %v1411 = vunpack.c.h.b16 %v1257
      %v1412 = vunpack.c.h.b16 %v1258
      %v1413 = vunpack.c.l.b16 %v1259
      %v1414 = vunpack.c.l.b16 %v1260
      %v1415 = vunpack.c.h.b16 %v1259
      %v1416 = vunpack.c.h.b16 %v1260
      %v1417 = vunpack.c.l.b16 %v1261
      %v1418 = vunpack.c.l.b16 %v1262
      %v1419 = vunpack.c.h.b16 %v1261
      %v1420 = vunpack.c.h.b16 %v1262
      %v1421 = vunpack.c.l.b16 %v1263
      %v1422 = vunpack.c.l.b16 %v1264
      %v1423 = vunpack.c.h.b16 %v1263
      %v1424 = vunpack.c.h.b16 %v1264
      %v1425 = vunpack.c.l.b16 %v1265
      %v1426 = vunpack.c.l.b16 %v1266
      %v1427 = vunpack.c.h.b16 %v1265
      %v1428 = vunpack.c.h.b16 %v1266
      %v1429 = vunpack.c.l.b16 %v1267
      %v1430 = vunpack.c.l.b16 %v1268
      %v1431 = vunpack.c.h.b16 %v1267
      %v1432 = vunpack.c.h.b16 %v1268
      %v1433 = vunpack.c.l.b16 %v1269
      %v1434 = vunpack.c.l.b16 %v1270
      %v1435 = vunpack.c.h.b16 %v1269
      %v1436 = vunpack.c.h.b16 %v1270
      %v1437 = vunpack.c.l.b16 %v1271
      %v1438 = vunpack.c.l.b16 %v1272
      %v1439 = vunpack.c.h.b16 %v1271
      %v1440 = vunpack.c.h.b16 %v1272
      %v1441 = vunpack.c.l.b16 %v1273
      %v1442 = vunpack.c.l.b16 %v1274
      %v1443 = vunpack.c.h.b16 %v1273
      %v1444 = vunpack.c.h.b16 %v1274
      %v1445 = vunpack.c.l.b16 %v1275
      %v1446 = vunpack.c.l.b16 %v1276
      %v1447 = vunpack.c.h.b16 %v1275
      %v1448 = vunpack.c.h.b16 %v1276
      %v1449 = vunpack.c.l.b16 %v1277
      %v1450 = vunpack.c.l.b16 %v1278
      %v1451 = vunpack.c.h.b16 %v1277
      %v1452 = vunpack.c.h.b16 %v1278
      %v1453 = vunpack.c.l.b16 %v1279
      %v1454 = vunpack.c.l.b16 %v1280
      %v1455 = vunpack.c.h.b16 %v1279
      %v1456 = vunpack.c.h.b16 %v1280
      %v1457 = vunpack.c.l.b16 %v1281
      %v1458 = vunpack.c.l.b16 %v1282
      %v1459 = vunpack.c.h.b16 %v1281
      %v1460 = vunpack.c.h.b16 %v1282
      %v1461 = vunpack.c.l.b16 %v1283
      %v1462 = vunpack.c.l.b16 %v1284
      %v1463 = vunpack.c.h.b16 %v1283
      %v1464 = vunpack.c.h.b16 %v1284
      %v1465 = vunpack.c.l.b16 %v1285
      %v1466 = vunpack.c.l.b16 %v1286
      %v1467 = vunpack.c.h.b16 %v1285
      %v1468 = vunpack.c.h.b16 %v1286
      %v1469 = vunpack.c.l.b16 %v1287
      %v1470 = vunpack.c.l.b16 %v1288
      %v1471 = vunpack.c.h.b16 %v1287
      %v1472 = vunpack.c.h.b16 %v1288
      %v1473 = vunpack.c.l.b16 %v1289
      %v1474 = vunpack.c.l.b16 %v1290
      %v1475 = vunpack.c.h.b16 %v1289
      %v1476 = vunpack.c.h.b16 %v1290
      %v1477 = vunpack.c.l.b16 %v1291
      %v1478 = vunpack.c.l.b16 %v1292
      %v1479 = vunpack.c.h.b16 %v1291
      %v1480 = vunpack.c.h.b16 %v1292
      %v1481 = vunpack.c.l.b16 %v1293
      %v1482 = vunpack.c.l.b16 %v1294
      %v1483 = vunpack.c.h.b16 %v1293
      %v1484 = vunpack.c.h.b16 %v1294
      %v1485 = vunpack.c.l.b16 %v1295
      %v1486 = vunpack.c.l.b16 %v1296
      %v1487 = vunpack.c.h.b16 %v1295
      %v1488 = vunpack.c.h.b16 %v1296
      %v1489 = vpack.c.b16 %v1362, %v1361
      %v1490 = vpack.c.b16 %v1364, %v1363
      %v1491 = vpack.c.b16 %v1366, %v1365
      %v1492 = vpack.c.b16 %v1368, %v1367
      %v1493 = vpack.c.b16 %v1370, %v1369
      %v1494 = vpack.c.b16 %v1372, %v1371
      %v1495 = vpack.c.b16 %v1374, %v1373
      %v1496 = vpack.c.b16 %v1376, %v1375
      %v1497 = vpack.c.b16 %v1378, %v1377
      %v1498 = vpack.c.b16 %v1380, %v1379
      %v1499 = vpack.c.b16 %v1382, %v1381
      %v1500 = vpack.c.b16 %v1384, %v1383
      %v1501 = vpack.c.b16 %v1386, %v1385
      %v1502 = vpack.c.b16 %v1388, %v1387
      %v1503 = vpack.c.b16 %v1390, %v1389
      %v1504 = vpack.c.b16 %v1392, %v1391
      %v1505 = vpack.c.b16 %v1394, %v1393
      %v1506 = vpack.c.b16 %v1396, %v1395
      %v1507 = vpack.c.b16 %v1398, %v1397
      %v1508 = vpack.c.b16 %v1400, %v1399
      %v1509 = vpack.c.b16 %v1402, %v1401
      %v1510 = vpack.c.b16 %v1404, %v1403
      %v1511 = vpack.c.b16 %v1406, %v1405
      %v1512 = vpack.c.b16 %v1408, %v1407
      %v1513 = vpack.c.b16 %v1410, %v1409
      %v1514 = vpack.c.b16 %v1412, %v1411
      %v1515 = vpack.c.b16 %v1414, %v1413
      %v1516 = vpack.c.b16 %v1416, %v1415
      %v1517 = vpack.c.b16 %v1418, %v1417
      %v1518 = vpack.c.b16 %v1420, %v1419
      %v1519 = vpack.c.b16 %v1422, %v1421
      %v1520 = vpack.c.b16 %v1424, %v1423
      %v1521 = vpack.c.b16 %v1426, %v1425
      %v1522 = vpack.c.b16 %v1428, %v1427
      %v1523 = vpack.c.b16 %v1430, %v1429
      %v1524 = vpack.c.b16 %v1432, %v1431
      %v1525 = vpack.c.b16 %v1434, %v1433
      %v1526 = vpack.c.b16 %v1436, %v1435
      %v1527 = vpack.c.b16 %v1438, %v1437
      %v1528 = vpack.c.b16 %v1440, %v1439
      %v1529 = vpack.c.b16 %v1442, %v1441
      %v1530 = vpack.c.b16 %v1444, %v1443
      %v1531 = vpack.c.b16 %v1446, %v1445
      %v1532 = vpack.c.b16 %v1448, %v1447
      %v1533 = vpack.c.b16 %v1450, %v1449
      %v1534 = vpack.c.b16 %v1452, %v1451
      %v1535 = vpack.c.b16 %v1454, %v1453
      %v1536 = vpack.c.b16 %v1456, %v1455
      %v1537 = vpack.c.b16 %v1458, %v1457
      %v1538 = vpack.c.b16 %v1460, %v1459
      %v1539 = vpack.c.b16 %v1462, %v1461
      %v1540 = vpack.c.b16 %v1464, %v1463
      %v1541 = vpack.c.b16 %v1466, %v1465
      %v1542 = vpack.c.b16 %v1468, %v1467
      %v1543 = vpack.c.b16 %v1470, %v1469
      %v1544 = vpack.c.b16 %v1472, %v1471
      %v1545 = vpack.c.b16 %v1474, %v1473
      %v1546 = vpack.c.b16 %v1476, %v1475
      %v1547 = vpack.c.b16 %v1478, %v1477
      %v1548 = vpack.c.b16 %v1480, %v1479
      %v1549 = vpack.c.b16 %v1482, %v1481
      %v1550 = vpack.c.b16 %v1484, %v1483
      %v1551 = vpack.c.b16 %v1486, %v1485
      %v1552 = vpack.c.b16 %v1488, %v1487
      %1617 = vst [vmem:[#allocation8] sm:$0xff] %v1489
      %1618 = vst [vmem:[#allocation8 + $0x8] sm:$0xff] %v1490
      %1619 = vst [vmem:[#allocation8 + $0x10] sm:$0xff] %v1491
      %1620 = vst [vmem:[#allocation8 + $0x18] sm:$0xff] %v1492
      %1621 = vst [vmem:[#allocation8 + $0x20] sm:$0xff] %v1493
      %1622 = vst [vmem:[#allocation8 + $0x28] sm:$0xff] %v1494
      %1623 = vst [vmem:[#allocation8 + $0x30] sm:$0xff] %v1495
      %1624 = vst [vmem:[#allocation8 + $0x38] sm:$0xff] %v1496
      %1625 = vst [vmem:[#allocation8 + $0x40] sm:$0xff] %v1497
      %1626 = vst [vmem:[#allocation8 + $0x48] sm:$0xff] %v1498
      %1627 = vst [vmem:[#allocation8 + $0x50] sm:$0xff] %v1499
      %1628 = vst [vmem:[#allocation8 + $0x58] sm:$0xff] %v1500
      %1629 = vst [vmem:[#allocation8 + $0x60] sm:$0xff] %v1501
      %1630 = vst [vmem:[#allocation8 + $0x68] sm:$0xff] %v1502
      %1631 = vst [vmem:[#allocation8 + $0x70] sm:$0xff] %v1503
      %1632 = vst [vmem:[#allocation8 + $0x78] sm:$0xff] %v1504
      %1633 = vst [vmem:[#allocation8 + $0x80] sm:$0xff] %v1505
      %1634 = vst [vmem:[#allocation8 + $0x88] sm:$0xff] %v1506
      %1635 = vst [vmem:[#allocation8 + $0x90] sm:$0xff] %v1507
      %1636 = vst [vmem:[#allocation8 + $0x98] sm:$0xff] %v1508
      %1637 = vst [vmem:[#allocation8 + $0xa0] sm:$0xff] %v1509
      %1638 = vst [vmem:[#allocation8 + $0xa8] sm:$0xff] %v1510
      %1639 = vst [vmem:[#allocation8 + $0xb0] sm:$0xff] %v1511
      %1640 = vst [vmem:[#allocation8 + $0xb8] sm:$0xff] %v1512
      %1641 = vst [vmem:[#allocation8 + $0xc0] sm:$0xff] %v1513
      %1642 = vst [vmem:[#allocation8 + $0xc8] sm:$0xff] %v1514
      %1643 = vst [vmem:[#allocation8 + $0xd0] sm:$0xff] %v1515
      %1644 = vst [vmem:[#allocation8 + $0xd8] sm:$0xff] %v1516
      %1645 = vst [vmem:[#allocation8 + $0xe0] sm:$0xff] %v1517
      %1646 = vst [vmem:[#allocation8 + $0xe8] sm:$0xff] %v1518
      %1647 = vst [vmem:[#allocation8 + $0xf0] sm:$0xff] %v1519
      %1648 = vst [vmem:[#allocation8 + $0xf8] sm:$0xff] %v1520
      %1649 = vst [vmem:[#allocation8 + $0x100] sm:$0xff] %v1521
      %1650 = vst [vmem:[#allocation8 + $0x108] sm:$0xff] %v1522
      %1651 = vst [vmem:[#allocation8 + $0x110] sm:$0xff] %v1523
      %1652 = vst [vmem:[#allocation8 + $0x118] sm:$0xff] %v1524
      %1653 = vst [vmem:[#allocation8 + $0x120] sm:$0xff] %v1525
      %1654 = vst [vmem:[#allocation8 + $0x128] sm:$0xff] %v1526
      %1655 = vst [vmem:[#allocation8 + $0x130] sm:$0xff] %v1527
      %1656 = vst [vmem:[#allocation8 + $0x138] sm:$0xff] %v1528
      %1657 = vst [vmem:[#allocation8 + $0x140] sm:$0xff] %v1529
      %1658 = vst [vmem:[#allocation8 + $0x148] sm:$0xff] %v1530
      %1659 = vst [vmem:[#allocation8 + $0x150] sm:$0xff] %v1531
      %1660 = vst [vmem:[#allocation8 + $0x158] sm:$0xff] %v1532
      %1661 = vst [vmem:[#allocation8 + $0x160] sm:$0xff] %v1533
      %1662 = vst [vmem:[#allocation8 + $0x168] sm:$0xff] %v1534
      %1663 = vst [vmem:[#allocation8 + $0x170] sm:$0xff] %v1535
      %1664 = vst [vmem:[#allocation8 + $0x178] sm:$0xff] %v1536
      %1665 = vst [vmem:[#allocation8 + $0x180] sm:$0xff] %v1537
      %1666 = vst [vmem:[#allocation8 + $0x188] sm:$0xff] %v1538
      %1667 = vst [vmem:[#allocation8 + $0x190] sm:$0xff] %v1539
      %1668 = vst [vmem:[#allocation8 + $0x198] sm:$0xff] %v1540
      %1669 = vst [vmem:[#allocation8 + $0x1a0] sm:$0xff] %v1541
      %1670 = vst [vmem:[#allocation8 + $0x1a8] sm:$0xff] %v1542
      %1671 = vst [vmem:[#allocation8 + $0x1b0] sm:$0xff] %v1543
      %1672 = vst [vmem:[#allocation8 + $0x1b8] sm:$0xff] %v1544
      %1673 = vst [vmem:[#allocation8 + $0x1c0] sm:$0xff] %v1545
      %1674 = vst [vmem:[#allocation8 + $0x1c8] sm:$0xff] %v1546
      %1675 = vst [vmem:[#allocation8 + $0x1d0] sm:$0xff] %v1547
      %1676 = vst [vmem:[#allocation8 + $0x1d8] sm:$0xff] %v1548
      %1677 = vst [vmem:[#allocation8 + $0x1e0] sm:$0xff] %v1549
      %1678 = vst [vmem:[#allocation8 + $0x1e8] sm:$0xff] %v1550
      %1679 = vst [vmem:[#allocation8 + $0x1f0] sm:$0xff] %v1551
      %1680 = vst [vmem:[#allocation8 + $0x1f8] sm:$0xff] %v1552
    $region25: #{tpu_custom_call.1} parent=1 // pred_fallthru
      _
    // Predicated region
    $region26: #{tpu_custom_call.1} parent=1 // pred_check
      _
    $region27: #{tpu_custom_call.1} parent=1 // pred_check_branch
      %1682 = sbr.rel (0) target = $region29
    $region28: #{tpu_custom_call.1} parent=1 // pred_region
      %s1684 = ssub.s32 8192, 8192
      %1685 = vsyncadd [#allocation5], %s1684
      %s1686 = sshll.u32 [#allocation8], 4
      %s1687 = int_to_ptr.vmem [resolvable:$true] %s1686
      %1692 = dma.vmem_to_hbm [thread:$0]  %s1687, 8192, %s2, [#allocation5], 128, 128, 8
    $region29: #{tpu_custom_call.1} parent=1 // pred_fallthru
      _
    // Predicated region
    $region30: #{tpu_custom_call.1} parent=1 // pred_check
      _
    $region31: #{tpu_custom_call.1} parent=1 // pred_check_branch
      %1694 = sbr.rel (0) target = $region33
    $region32: #{tpu_custom_call.1} parent=1 // pred_region
      %1695 = dma.done [#allocation5], 8192
    $region33: #{tpu_custom_call.1} parent=1 // pred_fallthru
      _
    %1696 = vsyncpa [#allocation4], 1
    %1697 = vsyncpa [#allocation7], 1
    %1698 = vsyncpa [#allocation5], 1

</llo_original>
